<compile_context>
chip_gen: v7x
topology: tpu7x:2x2x1
jax: 0.10.0
libtpu: 0.0.40
codegen_flags: <defaults>
</compile_context>

<pallas_src>
import math
from functools import partial

import jax
import jax.numpy as jnp
from jax.experimental import pallas as pl
from jax.experimental.pallas import tpu as pltpu


# ----------------------------- encoder kernel (one layer per grid step) ------

def _encoder_layer_kernel(nhead, eps, B, S,
                          emb_ref, pe_ref,
                          wqkv_ref, bqkv_ref, wo_ref, bo_ref,
                          w1_ref, b1_ref, w2_ref, b2_ref,
                          g1_ref, be1_ref, g2_ref, be2_ref,
                          x_ref,            # output block: (N, D) fp32, persistent carry
                          ctx_ref):         # scratch: (N, D) fp32 head-concat buffer
    l = pl.program_id(0)
    D = pe_ref.shape[-1]
    N = B * S
    hd = D // nhead
    scale = 1.0 / math.sqrt(hd)
    bf16 = jnp.bfloat16

    # ---- first grid step: positional-encoding add (dropout = identity) -------
    @pl.when(l == 0)
    def _():
        x_ref[...] = (emb_ref[...].astype(jnp.float32)
                      + pe_ref[...][None, :, :]).reshape(N, D)

    x2d = x_ref[...]                                           # (N, D) fp32 carry

    # ---- multi-head self-attention -------------------------------------------
    qkv = jnp.dot(x2d.astype(bf16), wqkv_ref[0],
                  preferred_element_type=jnp.float32) + bqkv_ref[0]   # (N, 3D) f32
    qkv = qkv.astype(bf16)                                     # single cast for all heads

    # causal mask predicate built in-kernel (no (S,S) fp32 tensor anywhere)
    row = jax.lax.broadcasted_iota(jnp.int32, (1, S, S), 1)
    col = jax.lax.broadcasted_iota(jnp.int32, (1, S, S), 2)
    banned = col > row                                         # (1, S, S) bool

    # TODO(synk): at larger head_dim replace this per-head loop with head-batched
    # 4D einsums ('bqhd,bkhd->bhqk'); per-head 3D einsums are kept because they
    # lower robustly at these tiny shapes.
    for h in range(nhead):
        qh = qkv[:, h * hd:(h + 1) * hd].reshape(B, S, hd)
        kh = qkv[:, D + h * hd:D + (h + 1) * hd].reshape(B, S, hd)
        vh = qkv[:, 2 * D + h * hd:2 * D + (h + 1) * hd].reshape(B, S, hd)

        s = jnp.einsum('bqd,bkd->bqk', qh, kh,
                       preferred_element_type=jnp.float32) * scale    # (B,S,S) f32
        s = jnp.where(banned, -1e30, s)
        s = s - jnp.max(s, axis=-1, keepdims=True)
        p = jnp.exp(s)
        p = p * pl.reciprocal(jnp.sum(p, axis=-1, keepdims=True), approx=True)

        oh = jnp.einsum('bqk,bkd->bqd', p.astype(bf16), vh,
                        preferred_element_type=jnp.float32)            # (B,S,hd)
        ctx_ref[:, h * hd:(h + 1) * hd] = oh.reshape(N, hd)            # assemble lanes

    # single full-depth output projection (K = D) instead of nhead K=hd folds
    attn = jnp.dot(ctx_ref[...].astype(bf16), wo_ref[0],
                   preferred_element_type=jnp.float32) + bo_ref[0]     # (N, D)

    # ---- residual + LayerNorm 1 (fp32) ----------------------------------------
    y = x2d + attn
    mu = jnp.mean(y, axis=-1, keepdims=True)
    var = jnp.mean(jnp.square(y - mu), axis=-1, keepdims=True)
    y = (y - mu) * jax.lax.rsqrt(var + eps) * g1_ref[0] + be1_ref[0]

    # ---- feed-forward (ReLU) + residual + LayerNorm 2 --------------------------
    ffh = jnp.dot(y.astype(bf16), w1_ref[0],
                  preferred_element_type=jnp.float32) + b1_ref[0]
    ffh = jnp.maximum(ffh, 0.0)
    ff = jnp.dot(ffh.astype(bf16), w2_ref[0],
                 preferred_element_type=jnp.float32) + b2_ref[0]
    z = y + ff
    mu2 = jnp.mean(z, axis=-1, keepdims=True)
    var2 = jnp.mean(jnp.square(z - mu2), axis=-1, keepdims=True)
    x_ref[...] = (z - mu2) * jax.lax.rsqrt(var2 + eps) * g2_ref[0] + be2_ref[0]


# ----------------------------- vocab projection kernel -----------------------

def _vocab_proj_kernel(x_ref, w_ref, b_ref, o_ref):
    o_ref[...] = jnp.dot(x_ref[...].astype(jnp.bfloat16), w_ref[...],
                         preferred_element_type=jnp.float32) + b_ref[...]


# ----------------------------- VMEM sizing helpers ----------------------------

def _round_up(x, m):
    return ((x + m - 1) // m) * m


def _padded_bytes(shape, dtype):
    """Rough (8,128)-tile-padded VMEM footprint of one buffer."""
    itemsize = jnp.dtype(dtype).itemsize
    dims = [int(d) for d in shape]
    if len(dims) == 1:
        dims = [1] + dims
    dims[-1] = _round_up(dims[-1], 128)
    dims[-2] = _round_up(dims[-2], 8)
    n = 1
    for d in dims:
        n *= d
    return n * itemsize


def _vmem_limit(resident_bytes, double_buffered_bytes):
    est = resident_bytes + 2 * double_buffered_bytes
    return int(min(64 * 1024 * 1024, max(8 * 1024 * 1024, 4 * est)))


# ----------------------------- wrapper ----------------------------------------

def transformer_net_forward(src, params, nhead):
    """src: (batch, seq) int32 token ids (same as the PyTorch forward input).
    Returns (seq, batch, n_vocab) float32 logits, matching the reference."""
    B, S = src.shape
    D = params['pe'].shape[1]
    H = params['w1'].shape[-1]
    V = params['embedding'].shape[0]
    Vp = params['w_out'].shape[1]
    L = params['wqkv'].shape[0]
    N = B * S

    # TODO(synk): embedding gather kept as an XLA jnp.take; a PrefetchScalarGridSpec
    # + pl.Element row-gather would move it in-kernel and avoid this HBM round-trip.
    emb = jnp.take(params['embedding'], src, axis=0).astype(jnp.bfloat16)  # (B,S,D)
    pe = params['pe'][:S]                                                  # (S,D) f32

    # --- encoder: grid over layers, per-layer weights streamed & double-buffered
    resident = (_padded_bytes((B, S, D), jnp.bfloat16)
                + _padded_bytes((S, D), jnp.float32)
                + 2 * _padded_bytes((N, D), jnp.float32))      # out carry + ctx scratch
    per_layer = (_padded_bytes((1, D, 3 * D), jnp.bfloat16)
                 + _padded_bytes((1, D, D), jnp.bfloat16)
                 + _padded_bytes((1, D, H), jnp.bfloat16)
                 + _padded_bytes((1, H, D), jnp.bfloat16)
                 + _padded_bytes((1, 1, 3 * D), jnp.float32)
                 + 7 * _padded_bytes((1, 1, D), jnp.float32)
                 + _padded_bytes((1, 1, H), jnp.float32))
    enc_vmem = _vmem_limit(resident, per_layer)

    lmap3 = lambda l: (l, 0, 0)
    enc = pl.pallas_call(
        partial(_encoder_layer_kernel, nhead, 1e-5, B, S),
        out_shape=jax.ShapeDtypeStruct((N, D), jnp.float32),
        grid_spec=pltpu.PrefetchScalarGridSpec(
            num_scalar_prefetch=0,
            grid=(L,),
            in_specs=[
                pl.BlockSpec((B, S, D), lambda l: (0, 0, 0)),   # emb (constant block)
                pl.BlockSpec((S, D), lambda l: (0, 0)),         # pe  (constant block)
                pl.BlockSpec((1, D, 3 * D), lmap3),             # wqkv[l]
                pl.BlockSpec((1, 1, 3 * D), lmap3),             # bqkv[l]
                pl.BlockSpec((1, D, D), lmap3),                 # wo[l]
                pl.BlockSpec((1, 1, D), lmap3),                 # bo[l]
                pl.BlockSpec((1, D, H), lmap3),                 # w1[l]
                pl.BlockSpec((1, 1, H), lmap3),                 # b1[l]
                pl.BlockSpec((1, H, D), lmap3),                 # w2[l]
                pl.BlockSpec((1, 1, D), lmap3),                 # b2[l]
                pl.BlockSpec((1, 1, D), lmap3),                 # g1[l]
                pl.BlockSpec((1, 1, D), lmap3),                 # be1[l]
                pl.BlockSpec((1, 1, D), lmap3),                 # g2[l]
                pl.BlockSpec((1, 1, D), lmap3),                 # be2[l]
            ],
            out_specs=pl.BlockSpec((N, D), lambda l: (0, 0)),   # resident activation carry
            scratch_shapes=[pltpu.VMEM((N, D), jnp.float32)],
        ),
        compiler_params=pltpu.CompilerParams(
            dimension_semantics=("arbitrary",),                 # layers are sequential
            vmem_limit_bytes=enc_vmem),
    )(emb, pe,
      params['wqkv'], params['bqkv'], params['wo'], params['bo'],
      params['w1'], params['b1'], params['w2'], params['b2'],
      params['g1'], params['be1'], params['g2'], params['be2'])

    # --- vocab projection: column-tiled over padded vocab, "parallel" grid axis
    if Vp % 512 == 0:
        tile_v = 512
    elif Vp % 256 == 0:
        tile_v = 256
    else:
        tile_v = 128
    n_vt = Vp // tile_v
    proj_vmem = _vmem_limit(
        _padded_bytes((N, D), jnp.float32) + _padded_bytes((N, tile_v), jnp.float32),
        _padded_bytes((D, tile_v), jnp.bfloat16) + _padded_bytes((1, tile_v), jnp.float32))
    out2d = pl.pallas_call(
        _vocab_proj_kernel,
        out_shape=jax.ShapeDtypeStruct((N, Vp), jnp.float32),
        grid_spec=pltpu.PrefetchScalarGridSpec(
            num_scalar_prefetch=0,
            grid=(n_vt,),
            in_specs=[
                pl.BlockSpec((N, D), lambda j: (0, 0)),
                pl.BlockSpec((D, tile_v), lambda j: (0, j)),
                pl.BlockSpec((1, tile_v), lambda j: (0, j)),
            ],
            out_specs=pl.BlockSpec((N, tile_v), lambda j: (0, j)),
        ),
        compiler_params=pltpu.CompilerParams(
            dimension_semantics=("parallel",),                  # v7x megacore-friendly
            vmem_limit_bytes=proj_vmem),
    )(enc, params['w_out'], params['b_out'])

    logits = out2d[:, :V].reshape(B, S, V)
    return logits.transpose(1, 0, 2)   # (seq, batch, n_vocab), like the reference


# ----------------------------- params -----------------------------------------

def init_params(key, n_vocab, d_model, hidden, num_layers, max_len=5000):
    ks = jax.random.split(key, 2 + num_layers)

    def dense(k, shape, scale=0.05):
        return jax.random.normal(k, shape, jnp.float32) * scale

    params = {}
    params['embedding'] = dense(ks[0], (n_vocab, d_model), 0.1)

    # sinusoidal positional encoding (same formula as PositionalEncoding)
    position = jnp.arange(max_len, dtype=jnp.float32)[:, None]
    div_term = jnp.exp(jnp.arange(0, d_model, 2, dtype=jnp.float32)
                       * (-math.log(10000.0) / d_model))
    pe = jnp.zeros((max_len, d_model), jnp.float32)
    pe = pe.at[:, 0::2].set(jnp.sin(position * div_term))
    pe = pe.at[:, 1::2].set(jnp.cos(position * div_term))
    params['pe'] = pe

    L = num_layers
    wqkv, wo, w1, w2 = [], [], [], []
    for i in range(num_layers):
        lk = jax.random.split(ks[2 + i], 4)
        wqkv.append(dense(lk[0], (d_model, 3 * d_model)))
        wo.append(dense(lk[1], (d_model, d_model)))
        w1.append(dense(lk[2], (d_model, hidden)))
        w2.append(dense(lk[3], (hidden, d_model)))

    # layer-stacked weights; matmul weights stored bf16 (fp32 accumulation in-kernel)
    params['wqkv'] = jnp.stack(wqkv).astype(jnp.bfloat16)        # (L, D, 3D)
    params['wo'] = jnp.stack(wo).astype(jnp.bfloat16)            # (L, D, D)
    params['w1'] = jnp.stack(w1).astype(jnp.bfloat16)            # (L, D, H)
    params['w2'] = jnp.stack(w2).astype(jnp.bfloat16)            # (L, H, D)
    params['bqkv'] = jnp.zeros((L, 1, 3 * d_model), jnp.float32)
    params['bo'] = jnp.zeros((L, 1, d_model), jnp.float32)
    params['b1'] = jnp.zeros((L, 1, hidden), jnp.float32)
    params['b2'] = jnp.zeros((L, 1, d_model), jnp.float32)
    params['g1'] = jnp.ones((L, 1, d_model), jnp.float32)
    params['be1'] = jnp.zeros((L, 1, d_model), jnp.float32)
    params['g2'] = jnp.ones((L, 1, d_model), jnp.float32)
    params['be2'] = jnp.zeros((L, 1, d_model), jnp.float32)

    # vocab projection padded to a lane-dense multiple of 128 (zeros sliced off in wrapper)
    v_pad = ((n_vocab + 127) // 128) * 128
    w_out = dense(ks[1], (d_model, n_vocab))
    params['w_out'] = (jnp.zeros((d_model, v_pad), jnp.float32)
                       .at[:, :n_vocab].set(w_out)).astype(jnp.bfloat16)
    params['b_out'] = jnp.zeros((1, v_pad), jnp.float32)
    return params


# ----------------------------- main -------------------------------------------

if __name__ == "__main__":
    key = jax.random.PRNGKey(0)
    n_vocab, d_model, hidden, nhead, num_layers = 64, 32, 64, 4, 2
    B, S = 2, 8

    pkey, skey = jax.random.split(key)
    params = init_params(pkey, n_vocab, d_model, hidden, num_layers)
    src = jax.random.randint(skey, (B, S), 0, n_vocab, dtype=jnp.int32)

    fwd = jax.jit(partial(transformer_net_forward, nhead=nhead))
    out = fwd(src, params)
    jax.block_until_ready(out)

    assert out.shape == (S, B, n_vocab), out.shape
    assert bool(jnp.all(jnp.isfinite(out)))
    print("KERNEL_OK")
</pallas_src>

<mosaic_0001>
module attributes {stable_mosaic.version = 11 : i64} {
  func.func @_vocab_proj_kernel(%arg0: i32, %arg1: memref<16x32xf32, #tpu.memory_space<vmem>>, %arg2: memref<32x128xbf16, #tpu.memory_space<vmem>>, %arg3: memref<1x128xf32, #tpu.memory_space<vmem>>, %arg4: memref<16x128xf32, #tpu.memory_space<vmem>>) attributes {dimension_semantics = [#tpu.dimension_semantics<parallel>], iteration_bounds = array<i64: 1>, scalar_prefetch = 0 : i64, scratch_operands = 0 : i64, tpu.core_type = #tpu.core_type<tc>, window_params = [{pipeline_mode = #tpu.pipeline_mode<synchronous>, transform_indices = @transform_0, window_bounds = array<i64: 16, 32>}, {transform_indices = @transform_1, window_bounds = array<i64: 32, 128>}, {transform_indices = @transform_2, window_bounds = array<i64: 1, 128>}, {transform_indices = @transform_3, window_bounds = array<i64: 16, 128>}]} {
    %c0 = arith.constant 0 : index
    %c0_0 = arith.constant 0 : index
    %0 = vector.load %arg1[%c0, %c0_0] : memref<16x32xf32, #tpu.memory_space<vmem>>, vector<16x32xf32>
    %1 = arith.truncf %0 : vector<16x32xf32> to vector<16x32xbf16>
    %c0_1 = arith.constant 0 : index
    %c0_2 = arith.constant 0 : index
    %2 = vector.load %arg2[%c0_1, %c0_2] : memref<32x128xbf16, #tpu.memory_space<vmem>>, vector<32x128xbf16>
    %cst = arith.constant dense<0.000000e+00> : vector<16x128xf32>
    %3 = tpu.matmul %1, %2, %cst {dimension_numbers = #tpu.dot_dimension_numbers<[1], [0], [0], [1], [0, 0, 1, 1], [], []>} : vector<16x32xbf16>, vector<32x128xbf16>, vector<16x128xf32> -> vector<16x128xf32>
    %c0_3 = arith.constant 0 : index
    %c0_4 = arith.constant 0 : index
    %4 = vector.load %arg3[%c0_3, %c0_4] : memref<1x128xf32, #tpu.memory_space<vmem>>, vector<1x128xf32>
    %5 = vector.broadcast %4 : vector<1x128xf32> to vector<16x128xf32>
    %6 = arith.addf %3, %5 : vector<16x128xf32>
    %c0_5 = arith.constant 0 : index
    %c0_6 = arith.constant 0 : index
    %7 = vector.load %arg4[%c0_5, %c0_6] : memref<16x128xf32, #tpu.memory_space<vmem>>, vector<16x128xf32>
    tpu.vector_store %arg4[%c0_5, %c0_6], %6 {strides = array<i32>} : memref<16x128xf32, #tpu.memory_space<vmem>>, vector<16x128xf32>,
    return
  }
  func.func @transform_0(%arg0: i32) -> (i32, i32) {
    %c0_i32 = arith.constant 0 : i32
    %c0_i32_0 = arith.constant 0 : i32
    %c0_i32_1 = arith.constant 0 : i32
    return %c0_i32, %c0_i32_0 : i32, i32
  }
  func.func @transform_1(%arg0: i32) -> (i32, i32) {
    %c0_i32 = arith.constant 0 : i32
    %c0_i32_0 = arith.constant 0 : i32
    return %c0_i32, %arg0 : i32, i32
  }
  func.func @transform_2(%arg0: i32) -> (i32, i32) {
    %c0_i32 = arith.constant 0 : i32
    %c0_i32_0 = arith.constant 0 : i32
    return %c0_i32, %arg0 : i32, i32
  }
  func.func @transform_3(%arg0: i32) -> (i32, i32) {
    %c0_i32 = arith.constant 0 : i32
    %c0_i32_0 = arith.constant 0 : i32
    return %c0_i32, %arg0 : i32, i32
  }
}

module attributes {stable_mosaic.version = 11 : i64} {
  func.func @_encoder_layer_kernel(%arg0: i32, %arg1: memref<2x8x32xbf16, #tpu.memory_space<vmem>>, %arg2: memref<8x32xf32, #tpu.memory_space<vmem>>, %arg3: memref<1x32x96xbf16, #tpu.memory_space<vmem>>, %arg4: memref<1x1x96xf32, #tpu.memory_space<vmem>>, %arg5: memref<1x32x32xbf16, #tpu.memory_space<vmem>>, %arg6: memref<1x1x32xf32, #tpu.memory_space<vmem>>, %arg7: memref<1x32x64xbf16, #tpu.memory_space<vmem>>, %arg8: memref<1x1x64xf32, #tpu.memory_space<vmem>>, %arg9: memref<1x64x32xbf16, #tpu.memory_space<vmem>>, %arg10: memref<1x1x32xf32, #tpu.memory_space<vmem>>, %arg11: memref<1x1x32xf32, #tpu.memory_space<vmem>>, %arg12: memref<1x1x32xf32, #tpu.memory_space<vmem>>, %arg13: memref<1x1x32xf32, #tpu.memory_space<vmem>>, %arg14: memref<1x1x32xf32, #tpu.memory_space<vmem>>, %arg15: memref<16x32xf32, #tpu.memory_space<vmem>>, %arg16: memref<16x32xf32, #tpu.memory_space<vmem>>) attributes {dimension_semantics = [#tpu.dimension_semantics<arbitrary>], iteration_bounds = array<i64: 2>, scalar_prefetch = 0 : i64, scratch_operands = 1 : i64, tpu.core_type = #tpu.core_type<tc>, window_params = [{pipeline_mode = #tpu.pipeline_mode<synchronous>, transform_indices = @transform_0, window_bounds = array<i64: 2, 8, 32>}, {pipeline_mode = #tpu.pipeline_mode<synchronous>, transform_indices = @transform_1, window_bounds = array<i64: 8, 32>}, {transform_indices = @transform_2, window_bounds = array<i64: 1, 32, 96>}, {transform_indices = @transform_3, window_bounds = array<i64: 1, 1, 96>}, {transform_indices = @transform_4, window_bounds = array<i64: 1, 32, 32>}, {transform_indices = @transform_5, window_bounds = array<i64: 1, 1, 32>}, {transform_indices = @transform_6, window_bounds = array<i64: 1, 32, 64>}, {transform_indices = @transform_7, window_bounds = array<i64: 1, 1, 64>}, {transform_indices = @transform_8, window_bounds = array<i64: 1, 64, 32>}, {transform_indices = @transform_9, window_bounds = array<i64: 1, 1, 32>}, {transform_indices = @transform_10, window_bounds = array<i64: 1, 1, 32>}, {transform_indices = @transform_11, window_bounds = array<i64: 1, 1, 32>}, {transform_indices = @transform_12, window_bounds = array<i64: 1, 1, 32>}, {transform_indices = @transform_13, window_bounds = array<i64: 1, 1, 32>}, {pipeline_mode = #tpu.pipeline_mode<synchronous>, transform_indices = @transform_14, window_bounds = array<i64: 16, 32>}]} {
    %c0_i32 = arith.constant 0 : i32
    %0 = arith.cmpi eq, %arg0, %c0_i32 : i32
    %1 = arith.extui %0 : i1 to i32
    %c0_i32_0 = arith.constant 0 : i32
    %2 = arith.cmpi ne, %1, %c0_i32_0 : i32
    scf.if %2 {
      %c0_85 = arith.constant 0 : index
      %c0_86 = arith.constant 0 : index
      %c0_87 = arith.constant 0 : index
      %206 = vector.load %arg1[%c0_85, %c0_86, %c0_87] : memref<2x8x32xbf16, #tpu.memory_space<vmem>>, vector<2x8x32xbf16>
      %207 = arith.extf %206 : vector<2x8x32xbf16> to vector<2x8x32xf32>
      %c0_88 = arith.constant 0 : index
      %c0_89 = arith.constant 0 : index
      %208 = vector.load %arg2[%c0_88, %c0_89] : memref<8x32xf32, #tpu.memory_space<vmem>>, vector<8x32xf32>
      %209 = vector.shape_cast %208 : vector<8x32xf32> to vector<1x8x32xf32>
      %210 = vector.broadcast %209 : vector<1x8x32xf32> to vector<2x8x32xf32>
      %211 = arith.addf %207, %210 : vector<2x8x32xf32>
      %212 = vector.shape_cast %211 : vector<2x8x32xf32> to vector<16x32xf32>
      %c0_90 = arith.constant 0 : index
      %c0_91 = arith.constant 0 : index
      %213 = vector.load %arg15[%c0_90, %c0_91] : memref<16x32xf32, #tpu.memory_space<vmem>>, vector<16x32xf32>
      tpu.vector_store %arg15[%c0_90, %c0_91], %212 {strides = array<i32>} : memref<16x32xf32, #tpu.memory_space<vmem>>, vector<16x32xf32>,
    } else {
    }
    %c0 = arith.constant 0 : index
    %c0_1 = arith.constant 0 : index
    %3 = vector.load %arg15[%c0, %c0_1] : memref<16x32xf32, #tpu.memory_space<vmem>>, vector<16x32xf32>
    %4 = arith.truncf %3 : vector<16x32xf32> to vector<16x32xbf16>
    %c0_2 = arith.constant 0 : index
    %c0_3 = arith.constant 0 : index
    %c0_4 = arith.constant 0 : index
    %5 = vector.load %arg3[%c0_2, %c0_3, %c0_4] : memref<1x32x96xbf16, #tpu.memory_space<vmem>>, vector<1x32x96xbf16>
    %6 = vector.shape_cast %5 : vector<1x32x96xbf16> to vector<32x96xbf16>
    %cst = arith.constant dense<0.000000e+00> : vector<16x96xf32>
    %7 = tpu.matmul %4, %6, %cst {dimension_numbers = #tpu.dot_dimension_numbers<[1], [0], [0], [1], [0, 0, 1, 1], [], []>} : vector<16x32xbf16>, vector<32x96xbf16>, vector<16x96xf32> -> vector<16x96xf32>
    %c0_5 = arith.constant 0 : index
    %c0_6 = arith.constant 0 : index
    %c0_7 = arith.constant 0 : index
    %8 = vector.load %arg4[%c0_5, %c0_6, %c0_7] : memref<1x1x96xf32, #tpu.memory_space<vmem>>, vector<1x1x96xf32>
    %9 = vector.shape_cast %8 : vector<1x1x96xf32> to vector<1x96xf32>
    %10 = vector.broadcast %9 : vector<1x96xf32> to vector<16x96xf32>
    %11 = arith.addf %7, %10 : vector<16x96xf32>
    %12 = arith.truncf %11 : vector<16x96xf32> to vector<16x96xbf16>
    %13 = tpu.iota {dimensions = array<i32: 1>} : vector<1x8x8xi32>
    %14 = tpu.iota {dimensions = array<i32: 2>} : vector<1x8x8xi32>
    %15 = arith.cmpi sgt, %14, %13 : vector<1x8x8xi32>
    %16 = vector.extract_strided_slice %12 {offsets = [0, 0], sizes = [16, 8], strides = [1, 1]} : vector<16x96xbf16> to vector<16x8xbf16>
    %17 = vector.shape_cast %16 : vector<16x8xbf16> to vector<2x8x8xbf16>
    %18 = vector.extract_strided_slice %12 {offsets = [0, 32], sizes = [16, 8], strides = [1, 1]} : vector<16x96xbf16> to vector<16x8xbf16>
    %19 = vector.shape_cast %18 : vector<16x8xbf16> to vector<2x8x8xbf16>
    %20 = vector.extract_strided_slice %12 {offsets = [0, 64], sizes = [16, 8], strides = [1, 1]} : vector<16x96xbf16> to vector<16x8xbf16>
    %21 = vector.shape_cast %20 : vector<16x8xbf16> to vector<2x8x8xbf16>
    "tpu.trace_start"() <{level = 10 : i32, message = "bqd,bkd->bqk"}> : () -> ()
    %cst_8 = arith.constant dense<0.000000e+00> : vector<2x8x8xf32>
    %22 = tpu.matmul %17, %19, %cst_8 {dimension_numbers = #tpu.dot_dimension_numbers<[2], [2], [1], [1], [0, 0, 0, 1, 1, 1], [0], [0]>} : vector<2x8x8xbf16>, vector<2x8x8xbf16>, vector<2x8x8xf32> -> vector<2x8x8xf32>
    "tpu.trace_stop"() : () -> ()
    %cst_9 = arith.constant 0.353553385 : f32
    %23 = vector.broadcast %cst_9 : f32 to vector<2x8x8xf32>
    %24 = arith.mulf %22, %23 : vector<2x8x8xf32>
    %cst_10 = arith.constant -1.000000e+30 : f32
    %25 = vector.shape_cast %15 : vector<1x8x8xi1> to vector<1x8x8xi1>
    %26 = vector.broadcast %25 : vector<1x8x8xi1> to vector<2x8x8xi1>
    %27 = vector.broadcast %cst_10 : f32 to vector<2x8x8xf32>
    %28 = arith.select %26, %27, %24 : vector<2x8x8xi1>, vector<2x8x8xf32>
    %cst_11 = arith.constant dense<0xFF800000> : vector<2x8xf32>
    %29 = vector.multi_reduction <maximumf>, %28, %cst_11 [2] : vector<2x8x8xf32> to vector<2x8xf32>
    %30 = vector.shape_cast %29 : vector<2x8xf32> to vector<2x8x1xf32>
    %31 = vector.broadcast %30 : vector<2x8x1xf32> to vector<2x8x8xf32>
    %32 = arith.subf %28, %31 : vector<2x8x8xf32>
    %33 = math.exp %32 : vector<2x8x8xf32>
    %cst_12 = arith.constant dense<0.000000e+00> : vector<2x8xf32>
    %34 = vector.multi_reduction <add>, %33, %cst_12 [2] : vector<2x8x8xf32> to vector<2x8xf32>
    %35 = vector.shape_cast %34 : vector<2x8xf32> to vector<2x8x1xf32>
    %36 = tpu.reciprocal %35 {approx = true} : vector<2x8x1xf32> -> vector<2x8x1xf32>
    %37 = vector.broadcast %36 : vector<2x8x1xf32> to vector<2x8x8xf32>
    %38 = arith.mulf %33, %37 : vector<2x8x8xf32>
    %39 = arith.truncf %38 : vector<2x8x8xf32> to vector<2x8x8xbf16>
    "tpu.trace_start"() <{level = 10 : i32, message = "bqk,bkd->bqd"}> : () -> ()
    %cst_13 = arith.constant dense<0.000000e+00> : vector<2x8x8xf32>
    %40 = tpu.matmul %39, %21, %cst_13 {dimension_numbers = #tpu.dot_dimension_numbers<[2], [1], [1], [2], [0, 0, 0, 1, 1, 2], [0], [0]>} : vector<2x8x8xbf16>, vector<2x8x8xbf16>, vector<2x8x8xf32> -> vector<2x8x8xf32>
    "tpu.trace_stop"() : () -> ()
    %41 = vector.shape_cast %40 : vector<2x8x8xf32> to vector<16x8xf32>
    %c0_14 = arith.constant 0 : index
    %c0_15 = arith.constant 0 : index
    %42 = vector.load %arg16[%c0_14, %c0_15] : memref<16x32xf32, #tpu.memory_space<vmem>>, vector<16x8xf32>
    tpu.vector_store %arg16[%c0_14, %c0_15], %41 {strides = array<i32>} : memref<16x32xf32, #tpu.memory_space<vmem>>, vector<16x8xf32>,
    %43 = vector.extract_strided_slice %12 {offsets = [0, 8], sizes = [16, 8], strides = [1, 1]} : vector<16x96xbf16> to vector<16x8xbf16>
    %44 = vector.shape_cast %43 : vector<16x8xbf16> to vector<2x8x8xbf16>
    %45 = vector.extract_strided_slice %12 {offsets = [0, 40], sizes = [16, 8], strides = [1, 1]} : vector<16x96xbf16> to vector<16x8xbf16>
    %46 = vector.shape_cast %45 : vector<16x8xbf16> to vector<2x8x8xbf16>
    %47 = vector.extract_strided_slice %12 {offsets = [0, 72], sizes = [16, 8], strides = [1, 1]} : vector<16x96xbf16> to vector<16x8xbf16>
    %48 = vector.shape_cast %47 : vector<16x8xbf16> to vector<2x8x8xbf16>
    "tpu.trace_start"() <{level = 10 : i32, message = "bqd,bkd->bqk"}> : () -> ()
    %cst_16 = arith.constant dense<0.000000e+00> : vector<2x8x8xf32>
    %49 = tpu.matmul %44, %46, %cst_16 {dimension_numbers = #tpu.dot_dimension_numbers<[2], [2], [1], [1], [0, 0, 0, 1, 1, 1], [0], [0]>} : vector<2x8x8xbf16>, vector<2x8x8xbf16>, vector<2x8x8xf32> -> vector<2x8x8xf32>
    "tpu.trace_stop"() : () -> ()
    %cst_17 = arith.constant 0.353553385 : f32
    %50 = vector.broadcast %cst_17 : f32 to vector<2x8x8xf32>
    %51 = arith.mulf %49, %50 : vector<2x8x8xf32>
    %cst_18 = arith.constant -1.000000e+30 : f32
    %52 = vector.shape_cast %15 : vector<1x8x8xi1> to vector<1x8x8xi1>
    %53 = vector.broadcast %52 : vector<1x8x8xi1> to vector<2x8x8xi1>
    %54 = vector.broadcast %cst_18 : f32 to vector<2x8x8xf32>
    %55 = arith.select %53, %54, %51 : vector<2x8x8xi1>, vector<2x8x8xf32>
    %cst_19 = arith.constant dense<0xFF800000> : vector<2x8xf32>
    %56 = vector.multi_reduction <maximumf>, %55, %cst_19 [2] : vector<2x8x8xf32> to vector<2x8xf32>
    %57 = vector.shape_cast %56 : vector<2x8xf32> to vector<2x8x1xf32>
    %58 = vector.broadcast %57 : vector<2x8x1xf32> to vector<2x8x8xf32>
    %59 = arith.subf %55, %58 : vector<2x8x8xf32>
    %60 = math.exp %59 : vector<2x8x8xf32>
    %cst_20 = arith.constant dense<0.000000e+00> : vector<2x8xf32>
    %61 = vector.multi_reduction <add>, %60, %cst_20 [2] : vector<2x8x8xf32> to vector<2x8xf32>
    %62 = vector.shape_cast %61 : vector<2x8xf32> to vector<2x8x1xf32>
    %63 = tpu.reciprocal %62 {approx = true} : vector<2x8x1xf32> -> vector<2x8x1xf32>
    %64 = vector.broadcast %63 : vector<2x8x1xf32> to vector<2x8x8xf32>
    %65 = arith.mulf %60, %64 : vector<2x8x8xf32>
    %66 = arith.truncf %65 : vector<2x8x8xf32> to vector<2x8x8xbf16>
    "tpu.trace_start"() <{level = 10 : i32, message = "bqk,bkd->bqd"}> : () -> ()
    %cst_21 = arith.constant dense<0.000000e+00> : vector<2x8x8xf32>
    %67 = tpu.matmul %66, %48, %cst_21 {dimension_numbers = #tpu.dot_dimension_numbers<[2], [1], [1], [2], [0, 0, 0, 1, 1, 2], [0], [0]>} : vector<2x8x8xbf16>, vector<2x8x8xbf16>, vector<2x8x8xf32> -> vector<2x8x8xf32>
    "tpu.trace_stop"() : () -> ()
    %68 = vector.shape_cast %67 : vector<2x8x8xf32> to vector<16x8xf32>
    %c0_22 = arith.constant 0 : index
    %c8 = arith.constant 8 : index
    %69 = vector.load %arg16[%c0_22, %c8] : memref<16x32xf32, #tpu.memory_space<vmem>>, vector<16x8xf32>
    tpu.vector_store %arg16[%c0_22, %c8], %68 {strides = array<i32>} : memref<16x32xf32, #tpu.memory_space<vmem>>, vector<16x8xf32>,
    %70 = vector.extract_strided_slice %12 {offsets = [0, 16], sizes = [16, 8], strides = [1, 1]} : vector<16x96xbf16> to vector<16x8xbf16>
    %71 = vector.shape_cast %70 : vector<16x8xbf16> to vector<2x8x8xbf16>
    %72 = vector.extract_strided_slice %12 {offsets = [0, 48], sizes = [16, 8], strides = [1, 1]} : vector<16x96xbf16> to vector<16x8xbf16>
    %73 = vector.shape_cast %72 : vector<16x8xbf16> to vector<2x8x8xbf16>
    %74 = vector.extract_strided_slice %12 {offsets = [0, 80], sizes = [16, 8], strides = [1, 1]} : vector<16x96xbf16> to vector<16x8xbf16>
    %75 = vector.shape_cast %74 : vector<16x8xbf16> to vector<2x8x8xbf16>
    "tpu.trace_start"() <{level = 10 : i32, message = "bqd,bkd->bqk"}> : () -> ()
    %cst_23 = arith.constant dense<0.000000e+00> : vector<2x8x8xf32>
    %76 = tpu.matmul %71, %73, %cst_23 {dimension_numbers = #tpu.dot_dimension_numbers<[2], [2], [1], [1], [0, 0, 0, 1, 1, 1], [0], [0]>} : vector<2x8x8xbf16>, vector<2x8x8xbf16>, vector<2x8x8xf32> -> vector<2x8x8xf32>
    "tpu.trace_stop"() : () -> ()
    %cst_24 = arith.constant 0.353553385 : f32
    %77 = vector.broadcast %cst_24 : f32 to vector<2x8x8xf32>
    %78 = arith.mulf %76, %77 : vector<2x8x8xf32>
    %cst_25 = arith.constant -1.000000e+30 : f32
    %79 = vector.shape_cast %15 : vector<1x8x8xi1> to vector<1x8x8xi1>
    %80 = vector.broadcast %79 : vector<1x8x8xi1> to vector<2x8x8xi1>
    %81 = vector.broadcast %cst_25 : f32 to vector<2x8x8xf32>
    %82 = arith.select %80, %81, %78 : vector<2x8x8xi1>, vector<2x8x8xf32>
    %cst_26 = arith.constant dense<0xFF800000> : vector<2x8xf32>
    %83 = vector.multi_reduction <maximumf>, %82, %cst_26 [2] : vector<2x8x8xf32> to vector<2x8xf32>
    %84 = vector.shape_cast %83 : vector<2x8xf32> to vector<2x8x1xf32>
    %85 = vector.broadcast %84 : vector<2x8x1xf32> to vector<2x8x8xf32>
    %86 = arith.subf %82, %85 : vector<2x8x8xf32>
    %87 = math.exp %86 : vector<2x8x8xf32>
    %cst_27 = arith.constant dense<0.000000e+00> : vector<2x8xf32>
    %88 = vector.multi_reduction <add>, %87, %cst_27 [2] : vector<2x8x8xf32> to vector<2x8xf32>
    %89 = vector.shape_cast %88 : vector<2x8xf32> to vector<2x8x1xf32>
    %90 = tpu.reciprocal %89 {approx = true} : vector<2x8x1xf32> -> vector<2x8x1xf32>
    %91 = vector.broadcast %90 : vector<2x8x1xf32> to vector<2x8x8xf32>
    %92 = arith.mulf %87, %91 : vector<2x8x8xf32>
    %93 = arith.truncf %92 : vector<2x8x8xf32> to vector<2x8x8xbf16>
    "tpu.trace_start"() <{level = 10 : i32, message = "bqk,bkd->bqd"}> : () -> ()
    %cst_28 = arith.constant dense<0.000000e+00> : vector<2x8x8xf32>
    %94 = tpu.matmul %93, %75, %cst_28 {dimension_numbers = #tpu.dot_dimension_numbers<[2], [1], [1], [2], [0, 0, 0, 1, 1, 2], [0], [0]>} : vector<2x8x8xbf16>, vector<2x8x8xbf16>, vector<2x8x8xf32> -> vector<2x8x8xf32>
    "tpu.trace_stop"() : () -> ()
    %95 = vector.shape_cast %94 : vector<2x8x8xf32> to vector<16x8xf32>
    %c0_29 = arith.constant 0 : index
    %c16 = arith.constant 16 : index
    %96 = vector.load %arg16[%c0_29, %c16] : memref<16x32xf32, #tpu.memory_space<vmem>>, vector<16x8xf32>
    tpu.vector_store %arg16[%c0_29, %c16], %95 {strides = array<i32>} : memref<16x32xf32, #tpu.memory_space<vmem>>, vector<16x8xf32>,
    %97 = vector.extract_strided_slice %12 {offsets = [0, 24], sizes = [16, 8], strides = [1, 1]} : vector<16x96xbf16> to vector<16x8xbf16>
    %98 = vector.shape_cast %97 : vector<16x8xbf16> to vector<2x8x8xbf16>
    %99 = vector.extract_strided_slice %12 {offsets = [0, 56], sizes = [16, 8], strides = [1, 1]} : vector<16x96xbf16> to vector<16x8xbf16>
    %100 = vector.shape_cast %99 : vector<16x8xbf16> to vector<2x8x8xbf16>
    %101 = vector.extract_strided_slice %12 {offsets = [0, 88], sizes = [16, 8], strides = [1, 1]} : vector<16x96xbf16> to vector<16x8xbf16>
    %102 = vector.shape_cast %101 : vector<16x8xbf16> to vector<2x8x8xbf16>
    "tpu.trace_start"() <{level = 10 : i32, message = "bqd,bkd->bqk"}> : () -> ()
    %cst_30 = arith.constant dense<0.000000e+00> : vector<2x8x8xf32>
    %103 = tpu.matmul %98, %100, %cst_30 {dimension_numbers = #tpu.dot_dimension_numbers<[2], [2], [1], [1], [0, 0, 0, 1, 1, 1], [0], [0]>} : vector<2x8x8xbf16>, vector<2x8x8xbf16>, vector<2x8x8xf32> -> vector<2x8x8xf32>
    "tpu.trace_stop"() : () -> ()
    %cst_31 = arith.constant 0.353553385 : f32
    %104 = vector.broadcast %cst_31 : f32 to vector<2x8x8xf32>
    %105 = arith.mulf %103, %104 : vector<2x8x8xf32>
    %cst_32 = arith.constant -1.000000e+30 : f32
    %106 = vector.shape_cast %15 : vector<1x8x8xi1> to vector<1x8x8xi1>
    %107 = vector.broadcast %106 : vector<1x8x8xi1> to vector<2x8x8xi1>
    %108 = vector.broadcast %cst_32 : f32 to vector<2x8x8xf32>
    %109 = arith.select %107, %108, %105 : vector<2x8x8xi1>, vector<2x8x8xf32>
    %cst_33 = arith.constant dense<0xFF800000> : vector<2x8xf32>
    %110 = vector.multi_reduction <maximumf>, %109, %cst_33 [2] : vector<2x8x8xf32> to vector<2x8xf32>
    %111 = vector.shape_cast %110 : vector<2x8xf32> to vector<2x8x1xf32>
    %112 = vector.broadcast %111 : vector<2x8x1xf32> to vector<2x8x8xf32>
    %113 = arith.subf %109, %112 : vector<2x8x8xf32>
    %114 = math.exp %113 : vector<2x8x8xf32>
    %cst_34 = arith.constant dense<0.000000e+00> : vector<2x8xf32>
    %115 = vector.multi_reduction <add>, %114, %cst_34 [2] : vector<2x8x8xf32> to vector<2x8xf32>
    %116 = vector.shape_cast %115 : vector<2x8xf32> to vector<2x8x1xf32>
    %117 = tpu.reciprocal %116 {approx = true} : vector<2x8x1xf32> -> vector<2x8x1xf32>
    %118 = vector.broadcast %117 : vector<2x8x1xf32> to vector<2x8x8xf32>
    %119 = arith.mulf %114, %118 : vector<2x8x8xf32>
    %120 = arith.truncf %119 : vector<2x8x8xf32> to vector<2x8x8xbf16>
    "tpu.trace_start"() <{level = 10 : i32, message = "bqk,bkd->bqd"}> : () -> ()
    %cst_35 = arith.constant dense<0.000000e+00> : vector<2x8x8xf32>
    %121 = tpu.matmul %120, %102, %cst_35 {dimension_numbers = #tpu.dot_dimension_numbers<[2], [1], [1], [2], [0, 0, 0, 1, 1, 2], [0], [0]>} : vector<2x8x8xbf16>, vector<2x8x8xbf16>, vector<2x8x8xf32> -> vector<2x8x8xf32>
    "tpu.trace_stop"() : () -> ()
    %122 = vector.shape_cast %121 : vector<2x8x8xf32> to vector<16x8xf32>
    %c0_36 = arith.constant 0 : index
    %c24 = arith.constant 24 : index
    %123 = vector.load %arg16[%c0_36, %c24] : memref<16x32xf32, #tpu.memory_space<vmem>>, vector<16x8xf32>
    tpu.vector_store %arg16[%c0_36, %c24], %122 {strides = array<i32>} : memref<16x32xf32, #tpu.memory_space<vmem>>, vector<16x8xf32>,
    %c0_37 = arith.constant 0 : index
    %c0_38 = arith.constant 0 : index
    %124 = vector.load %arg16[%c0_37, %c0_38] : memref<16x32xf32, #tpu.memory_space<vmem>>, vector<16x32xf32>
    %125 = arith.truncf %124 : vector<16x32xf32> to vector<16x32xbf16>
    %c0_39 = arith.constant 0 : index
    %c0_40 = arith.constant 0 : index
    %c0_41 = arith.constant 0 : index
    %126 = vector.load %arg5[%c0_39, %c0_40, %c0_41] : memref<1x32x32xbf16, #tpu.memory_space<vmem>>, vector<1x32x32xbf16>
    %127 = vector.shape_cast %126 : vector<1x32x32xbf16> to vector<32x32xbf16>
    %cst_42 = arith.constant dense<0.000000e+00> : vector<16x32xf32>
    %128 = tpu.matmul %125, %127, %cst_42 {dimension_numbers = #tpu.dot_dimension_numbers<[1], [0], [0], [1], [0, 0, 1, 1], [], []>} : vector<16x32xbf16>, vector<32x32xbf16>, vector<16x32xf32> -> vector<16x32xf32>
    %c0_43 = arith.constant 0 : index
    %c0_44 = arith.constant 0 : index
    %c0_45 = arith.constant 0 : index
    %129 = vector.load %arg6[%c0_43, %c0_44, %c0_45] : memref<1x1x32xf32, #tpu.memory_space<vmem>>, vector<1x1x32xf32>
    %130 = vector.shape_cast %129 : vector<1x1x32xf32> to vector<1x32xf32>
    %131 = vector.broadcast %130 : vector<1x32xf32> to vector<16x32xf32>
    %132 = arith.addf %128, %131 : vector<16x32xf32>
    %133 = arith.addf %3, %132 : vector<16x32xf32>
    %cst_46 = arith.constant dense<0.000000e+00> : vector<16xf32>
    %134 = vector.multi_reduction <add>, %133, %cst_46 [1] : vector<16x32xf32> to vector<16xf32>
    %135 = vector.shape_cast %134 : vector<16xf32> to vector<16x1xf32>
    %cst_47 = arith.constant 3.200000e+01 : f32
    %136 = vector.broadcast %cst_47 : f32 to vector<16x1xf32>
    %137 = arith.divf %135, %136 : vector<16x1xf32>
    %138 = vector.broadcast %137 : vector<16x1xf32> to vector<16x32xf32>
    %139 = arith.subf %133, %138 : vector<16x32xf32>
    %140 = arith.mulf %139, %139 : vector<16x32xf32>
    %cst_48 = arith.constant dense<0.000000e+00> : vector<16xf32>
    %141 = vector.multi_reduction <add>, %140, %cst_48 [1] : vector<16x32xf32> to vector<16xf32>
    %142 = vector.shape_cast %141 : vector<16xf32> to vector<16x1xf32>
    %cst_49 = arith.constant 3.200000e+01 : f32
    %143 = vector.broadcast %cst_49 : f32 to vector<16x1xf32>
    %144 = arith.divf %142, %143 : vector<16x1xf32>
    %145 = vector.broadcast %137 : vector<16x1xf32> to vector<16x32xf32>
    %146 = arith.subf %133, %145 : vector<16x32xf32>
    %cst_50 = arith.constant 9.99999974E-6 : f32
    %147 = vector.broadcast %cst_50 : f32 to vector<16x1xf32>
    %148 = arith.addf %144, %147 : vector<16x1xf32>
    %149 = math.rsqrt %148 : vector<16x1xf32>
    %150 = vector.broadcast %149 : vector<16x1xf32> to vector<16x32xf32>
    %151 = arith.mulf %146, %150 : vector<16x32xf32>
    %c0_51 = arith.constant 0 : index
    %c0_52 = arith.constant 0 : index
    %c0_53 = arith.constant 0 : index
    %152 = vector.load %arg11[%c0_51, %c0_52, %c0_53] : memref<1x1x32xf32, #tpu.memory_space<vmem>>, vector<1x1x32xf32>
    %153 = vector.shape_cast %152 : vector<1x1x32xf32> to vector<1x32xf32>
    %154 = vector.broadcast %153 : vector<1x32xf32> to vector<16x32xf32>
    %155 = arith.mulf %151, %154 : vector<16x32xf32>
    %c0_54 = arith.constant 0 : index
    %c0_55 = arith.constant 0 : index
    %c0_56 = arith.constant 0 : index
    %156 = vector.load %arg12[%c0_54, %c0_55, %c0_56] : memref<1x1x32xf32, #tpu.memory_space<vmem>>, vector<1x1x32xf32>
    %157 = vector.shape_cast %156 : vector<1x1x32xf32> to vector<1x32xf32>
    %158 = vector.broadcast %157 : vector<1x32xf32> to vector<16x32xf32>
    %159 = arith.addf %155, %158 : vector<16x32xf32>
    %160 = arith.truncf %159 : vector<16x32xf32> to vector<16x32xbf16>
    %c0_57 = arith.constant 0 : index
    %c0_58 = arith.constant 0 : index
    %c0_59 = arith.constant 0 : index
    %161 = vector.load %arg7[%c0_57, %c0_58, %c0_59] : memref<1x32x64xbf16, #tpu.memory_space<vmem>>, vector<1x32x64xbf16>
    %162 = vector.shape_cast %161 : vector<1x32x64xbf16> to vector<32x64xbf16>
    %cst_60 = arith.constant dense<0.000000e+00> : vector<16x64xf32>
    %163 = tpu.matmul %160, %162, %cst_60 {dimension_numbers = #tpu.dot_dimension_numbers<[1], [0], [0], [1], [0, 0, 1, 1], [], []>} : vector<16x32xbf16>, vector<32x64xbf16>, vector<16x64xf32> -> vector<16x64xf32>
    %c0_61 = arith.constant 0 : index
    %c0_62 = arith.constant 0 : index
    %c0_63 = arith.constant 0 : index
    %164 = vector.load %arg8[%c0_61, %c0_62, %c0_63] : memref<1x1x64xf32, #tpu.memory_space<vmem>>, vector<1x1x64xf32>
    %165 = vector.shape_cast %164 : vector<1x1x64xf32> to vector<1x64xf32>
    %166 = vector.broadcast %165 : vector<1x64xf32> to vector<16x64xf32>
    %167 = arith.addf %163, %166 : vector<16x64xf32>
    %cst_64 = arith.constant 0.000000e+00 : f32
    %168 = vector.broadcast %cst_64 : f32 to vector<16x64xf32>
    %169 = arith.maximumf %167, %168 : vector<16x64xf32>
    %170 = arith.truncf %169 : vector<16x64xf32> to vector<16x64xbf16>
    %c0_65 = arith.constant 0 : index
    %c0_66 = arith.constant 0 : index
    %c0_67 = arith.constant 0 : index
    %171 = vector.load %arg9[%c0_65, %c0_66, %c0_67] : memref<1x64x32xbf16, #tpu.memory_space<vmem>>, vector<1x64x32xbf16>
    %172 = vector.shape_cast %171 : vector<1x64x32xbf16> to vector<64x32xbf16>
    %cst_68 = arith.constant dense<0.000000e+00> : vector<16x32xf32>
    %173 = tpu.matmul %170, %172, %cst_68 {dimension_numbers = #tpu.dot_dimension_numbers<[1], [0], [0], [1], [0, 0, 1, 1], [], []>} : vector<16x64xbf16>, vector<64x32xbf16>, vector<16x32xf32> -> vector<16x32xf32>
    %c0_69 = arith.constant 0 : index
    %c0_70 = arith.constant 0 : index
    %c0_71 = arith.constant 0 : index
    %174 = vector.load %arg10[%c0_69, %c0_70, %c0_71] : memref<1x1x32xf32, #tpu.memory_space<vmem>>, vector<1x1x32xf32>
    %175 = vector.shape_cast %174 : vector<1x1x32xf32> to vector<1x32xf32>
    %176 = vector.broadcast %175 : vector<1x32xf32> to vector<16x32xf32>
    %177 = arith.addf %173, %176 : vector<16x32xf32>
    %178 = arith.addf %159, %177 : vector<16x32xf32>
    %cst_72 = arith.constant dense<0.000000e+00> : vector<16xf32>
    %179 = vector.multi_reduction <add>, %178, %cst_72 [1] : vector<16x32xf32> to vector<16xf32>
    %180 = vector.shape_cast %179 : vector<16xf32> to vector<16x1xf32>
    %cst_73 = arith.constant 3.200000e+01 : f32
    %181 = vector.broadcast %cst_73 : f32 to vector<16x1xf32>
    %182 = arith.divf %180, %181 : vector<16x1xf32>
    %183 = vector.broadcast %182 : vector<16x1xf32> to vector<16x32xf32>
    %184 = arith.subf %178, %183 : vector<16x32xf32>
    %185 = arith.mulf %184, %184 : vector<16x32xf32>
    %cst_74 = arith.constant dense<0.000000e+00> : vector<16xf32>
    %186 = vector.multi_reduction <add>, %185, %cst_74 [1] : vector<16x32xf32> to vector<16xf32>
    %187 = vector.shape_cast %186 : vector<16xf32> to vector<16x1xf32>
    %cst_75 = arith.constant 3.200000e+01 : f32
    %188 = vector.broadcast %cst_75 : f32 to vector<16x1xf32>
    %189 = arith.divf %187, %188 : vector<16x1xf32>
    %190 = vector.broadcast %182 : vector<16x1xf32> to vector<16x32xf32>
    %191 = arith.subf %178, %190 : vector<16x32xf32>
    %cst_76 = arith.constant 9.99999974E-6 : f32
    %192 = vector.broadcast %cst_76 : f32 to vector<16x1xf32>
    %193 = arith.addf %189, %192 : vector<16x1xf32>
    %194 = math.rsqrt %193 : vector<16x1xf32>
    %195 = vector.broadcast %194 : vector<16x1xf32> to vector<16x32xf32>
    %196 = arith.mulf %191, %195 : vector<16x32xf32>
    %c0_77 = arith.constant 0 : index
    %c0_78 = arith.constant 0 : index
    %c0_79 = arith.constant 0 : index
    %197 = vector.load %arg13[%c0_77, %c0_78, %c0_79] : memref<1x1x32xf32, #tpu.memory_space<vmem>>, vector<1x1x32xf32>
    %198 = vector.shape_cast %197 : vector<1x1x32xf32> to vector<1x32xf32>
    %199 = vector.broadcast %198 : vector<1x32xf32> to vector<16x32xf32>
    %200 = arith.mulf %196, %199 : vector<16x32xf32>
    %c0_80 = arith.constant 0 : index
    %c0_81 = arith.constant 0 : index
    %c0_82 = arith.constant 0 : index
    %201 = vector.load %arg14[%c0_80, %c0_81, %c0_82] : memref<1x1x32xf32, #tpu.memory_space<vmem>>, vector<1x1x32xf32>
    %202 = vector.shape_cast %201 : vector<1x1x32xf32> to vector<1x32xf32>
    %203 = vector.broadcast %202 : vector<1x32xf32> to vector<16x32xf32>
    %204 = arith.addf %200, %203 : vector<16x32xf32>
    %c0_83 = arith.constant 0 : index
    %c0_84 = arith.constant 0 : index
    %205 = vector.load %arg15[%c0_83, %c0_84] : memref<16x32xf32, #tpu.memory_space<vmem>>, vector<16x32xf32>
    tpu.vector_store %arg15[%c0_83, %c0_84], %204 {strides = array<i32>} : memref<16x32xf32, #tpu.memory_space<vmem>>, vector<16x32xf32>,
    return
  }
  func.func @transform_0(%arg0: i32) -> (i32, i32, i32) {
    %c0_i32 = arith.constant 0 : i32
    %c0_i32_0 = arith.constant 0 : i32
    %c0_i32_1 = arith.constant 0 : i32
    %c0_i32_2 = arith.constant 0 : i32
    return %c0_i32, %c0_i32_0, %c0_i32_1 : i32, i32, i32
  }
  func.func @transform_1(%arg0: i32) -> (i32, i32) {
    %c0_i32 = arith.constant 0 : i32
    %c0_i32_0 = arith.constant 0 : i32
    %c0_i32_1 = arith.constant 0 : i32
    return %c0_i32, %c0_i32_0 : i32, i32
  }
  func.func @transform_2(%arg0: i32) -> (i32, i32, i32) {
    %c0_i32 = arith.constant 0 : i32
    %c0_i32_0 = arith.constant 0 : i32
    %c0_i32_1 = arith.constant 0 : i32
    return %arg0, %c0_i32, %c0_i32_0 : i32, i32, i32
  }
  func.func @transform_3(%arg0: i32) -> (i32, i32, i32) {
    %c0_i32 = arith.constant 0 : i32
    %c0_i32_0 = arith.constant 0 : i32
    %c0_i32_1 = arith.constant 0 : i32
    return %arg0, %c0_i32, %c0_i32_0 : i32, i32, i32
  }
  func.func @transform_4(%arg0: i32) -> (i32, i32, i32) {
    %c0_i32 = arith.constant 0 : i32
    %c0_i32_0 = arith.constant 0 : i32
    %c0_i32_1 = arith.constant 0 : i32
    return %arg0, %c0_i32, %c0_i32_0 : i32, i32, i32
  }
  func.func @transform_5(%arg0: i32) -> (i32, i32, i32) {
    %c0_i32 = arith.constant 0 : i32
    %c0_i32_0 = arith.constant 0 : i32
    %c0_i32_1 = arith.constant 0 : i32
    return %arg0, %c0_i32, %c0_i32_0 : i32, i32, i32
  }
  func.func @transform_6(%arg0: i32) -> (i32, i32, i32) {
    %c0_i32 = arith.constant 0 : i32
    %c0_i32_0 = arith.constant 0 : i32
    %c0_i32_1 = arith.constant 0 : i32
    return %arg0, %c0_i32, %c0_i32_0 : i32, i32, i32
  }
  func.func @transform_7(%arg0: i32) -> (i32, i32, i32) {
    %c0_i32 = arith.constant 0 : i32
    %c0_i32_0 = arith.constant 0 : i32
    %c0_i32_1 = arith.constant 0 : i32
    return %arg0, %c0_i32, %c0_i32_0 : i32, i32, i32
  }
  func.func @transform_8(%arg0: i32) -> (i32, i32, i32) {
    %c0_i32 = arith.constant 0 : i32
    %c0_i32_0 = arith.constant 0 : i32
    %c0_i32_1 = arith.constant 0 : i32
    return %arg0, %c0_i32, %c0_i32_0 : i32, i32, i32
  }
  func.func @transform_9(%arg0: i32) -> (i32, i32, i32) {
    %c0_i32 = arith.constant 0 : i32
    %c0_i32_0 = arith.constant 0 : i32
    %c0_i32_1 = arith.constant 0 : i32
    return %arg0, %c0_i32, %c0_i32_0 : i32, i32, i32
  }
  func.func @transform_10(%arg0: i32) -> (i32, i32, i32) {
    %c0_i32 = arith.constant 0 : i32
    %c0_i32_0 = arith.constant 0 : i32
    %c0_i32_1 = arith.constant 0 : i32
    return %arg0, %c0_i32, %c0_i32_0 : i32, i32, i32
  }
  func.func @transform_11(%arg0: i32) -> (i32, i32, i32) {
    %c0_i32 = arith.constant 0 : i32
    %c0_i32_0 = arith.constant 0 : i32
    %c0_i32_1 = arith.constant 0 : i32
    return %arg0, %c0_i32, %c0_i32_0 : i32, i32, i32
  }
  func.func @transform_12(%arg0: i32) -> (i32, i32, i32) {
    %c0_i32 = arith.constant 0 : i32
    %c0_i32_0 = arith.constant 0 : i32
    %c0_i32_1 = arith.constant 0 : i32
    return %arg0, %c0_i32, %c0_i32_0 : i32, i32, i32
  }
  func.func @transform_13(%arg0: i32) -> (i32, i32, i32) {
    %c0_i32 = arith.constant 0 : i32
    %c0_i32_0 = arith.constant 0 : i32
    %c0_i32_1 = arith.constant 0 : i32
    return %arg0, %c0_i32, %c0_i32_0 : i32, i32, i32
  }
  func.func @transform_14(%arg0: i32) -> (i32, i32) {
    %c0_i32 = arith.constant 0 : i32
    %c0_i32_0 = arith.constant 0 : i32
    %c0_i32_1 = arith.constant 0 : i32
    return %c0_i32, %c0_i32_0 : i32, i32
  }
}

</mosaic_0001>

<llo_original>
// kernel: transformer_net_forward.3
$region0: #{transformer_net_forward.3}
  #allocation0 [shape = 'u32[]', space=smem, size = 0x4, offset = 0x4, fixed_abs, tag = 'smem constant byte address 0x4 - core index']
  #allocation1 [shape = 'u32[144,128]{1,0:T(1,128)}', space=vmem, size = 0x12000, scoped, tag = 'internal scratch']
  %s0 = inlined_call_operand.vmem [shape: f32[16,32], index: 0, kind: input, shape index: {}]
  %s1 = inlined_call_operand.vmem [shape: bf16[32,128], index: 1, kind: input, shape index: {}]
  %s2 = inlined_call_operand.vmem [shape: f32[1,128], index: 2, kind: input, shape index: {}]
  %s3 = inlined_call_operand.vmem [shape: f32[16,128], index: 3, kind: output, shape index: {}]
  %s4 = sld [smem:[#allocation0]]
  $region22: #{transformer_net_forward.3} parent=0
    _
  %s6 = ssub.s32 1, %s4
  %s7 = scalar_select 0, %s6, %s4
  // Predicated region
  $region2: #{transformer_net_forward.3} parent=0 // pred_check
    _
  $region3: #{transformer_net_forward.3} parent=0 // pred_check_branch
    %9 = sbr.rel (0) target = $region5
  $region4: #{transformer_net_forward.3} parent=0 // pred_region
    _
  $region5: #{transformer_net_forward.3} parent=0 // pred_fallthru
    _
  // Predicated region
  $region6: #{transformer_net_forward.3} parent=0 // pred_check
    _
  $region7: #{transformer_net_forward.3} parent=0 // pred_check_branch
    %11 = sbr.rel (0) target = $region9
  $region8: #{transformer_net_forward.3} parent=0 // pred_region
    _
  $region9: #{transformer_net_forward.3} parent=0 // pred_fallthru
    _
  // Predicated region
  $region10: #{transformer_net_forward.3} parent=0 // pred_check
    _
  $region11: #{transformer_net_forward.3} parent=0 // pred_check_branch
    %13 = sbr.rel (0) target = $region13
  $region12: #{transformer_net_forward.3} parent=0 // pred_region
    _
  $region13: #{transformer_net_forward.3} parent=0 // pred_fallthru
    _
  %v15 = vld [vmem:[%s0] sm:$0xff]
  %v16 = vld [vmem:[%s0 + $0x8] sm:$0xff]
  %v17 = vpack.c.bf16 %v16, %v15
  %v18 = vld [vmem:[%s1] sm:$0xf]
  %v19 = vld [vmem:[%s1 + $0x4] sm:$0xf]
  %v20 = vld [vmem:[%s1 + $0x8] sm:$0xf]
  %v21 = vld [vmem:[%s1 + $0xc] sm:$0xf]
  %v22 = vld [vmem:[%s2] sm:$0x1]
  %v24 = vlaneseq
  %v25 = vshrl.u32 %v24, 7
  %v26 = vsub.s32 0, %v25
  %v27 = vrot.slane %v22, %v26
  %v33 = vunpack.c.l.b16 %v18
  %v34 = vunpack.c.l.b16 %v19
  %v35 = vunpack.c.l.b16 %v20
  %v36 = vunpack.c.l.b16 %v21
  %v37 = vpack.c.b16 %v34, %v33
  %v38 = vpack.c.b16 %v36, %v35
  %vm41 = vcmask 261120
  %v43 = vsel %vm41, %v17, 0
  %45 = vmatprep.subr.bf16.mxu0 0
  %46 = vmatpush1.bf16.msra.mxu0 %v37
  %47 = vmatprep.subr.bf16.mxu0 0
  %48 = vmatpush1.bf16.msra.mxu0 %v38
  %49 = vmatprep.subr.bf16.mxu0 0
  %50 = vmatpush1.bf16.msra.mxu0 0
  %51 = vmatprep.subr.bf16.mxu0 0
  %52 = vmatpush1.bf16.msra.mxu0 0
  %53 = vmatprep.subr.bf16.mxu0 0
  %54 = vmatpush1.bf16.msra.mxu0 0
  %55 = vmatprep.subr.bf16.mxu0 0
  %56 = vmatpush1.bf16.msra.mxu0 0
  %57 = vmatprep.subr.bf16.mxu0 0
  %58 = vmatpush1.bf16.msra.mxu0 0
  %59 = vmatprep.subr.bf16.mxu0 0
  %60 = vmatpush1.bf16.msra.mxu0 0
  %61 = vmatprep.subr.bf16.mxu0 0
  %62 = vmatpush1.bf16.msra.mxu0 0
  %63 = vmatprep.subr.bf16.mxu0 0
  %64 = vmatpush1.bf16.msra.mxu0 0
  %65 = vmatprep.subr.bf16.mxu0 0
  %66 = vmatpush1.bf16.msra.mxu0 0
  %67 = vmatprep.subr.bf16.mxu0 0
  %68 = vmatpush1.bf16.msra.mxu0 0
  %69 = vmatprep.subr.bf16.mxu0 0
  %70 = vmatpush1.bf16.msra.mxu0 0
  %71 = vmatprep.subr.bf16.mxu0 0
  %72 = vmatpush1.bf16.msra.mxu0 0
  %73 = vmatprep.subr.bf16.mxu0 0
  %74 = vmatpush1.bf16.msra.mxu0 0
  %75 = vmatprep.subr.bf16.mxu0 0
  %76 = vmatpush1.bf16.msra.mxu0 0
  %77 = vmatprep.mubr.bf16.mxu0 0
  %78 = vmatmul.mubr.bf16.gmra.mrb[0].mxu0 %v43
  %v79 = vpop.f32.mrb[0].mxu0
  %v80 = vadd.f32 %v27, %v79
  %v81 = vpop.f32.mrb[0].mxu0
  %v82 = vpop.f32.mrb[0].mxu0
  %v83 = vadd.f32 %v27, %v82
  %v84 = vpop.f32.mrb[0].mxu0
  %85 = vdwg.mxu0
  %86 = vst [vmem:[%s3] sm:$0xff] %v80
  %87 = vst [vmem:[%s3 + $0x8] sm:$0xff] %v83
  // Predicated region
  $region14: #{transformer_net_forward.3} parent=0 // pred_check
    _
  $region15: #{transformer_net_forward.3} parent=0 // pred_check_branch
    %89 = sbr.rel (0) target = $region17
  $region16: #{transformer_net_forward.3} parent=0 // pred_region
    _
  $region17: #{transformer_net_forward.3} parent=0 // pred_fallthru
    _
  // Predicated region
  $region18: #{transformer_net_forward.3} parent=0 // pred_check
    _
  $region19: #{transformer_net_forward.3} parent=0 // pred_check_branch
    %91 = sbr.rel (0) target = $region21
  $region20: #{transformer_net_forward.3} parent=0 // pred_region
    _
  $region21: #{transformer_net_forward.3} parent=0 // pred_fallthru
    _

// kernel: transformer_net_forward.2
$region0: #{transformer_net_forward.2}
  #allocation0 [shape = 'u32[]', space=smem, size = 0x4, offset = 0x4, fixed_abs, tag = 'smem constant byte address 0x4 - core index']
  #allocation1 [shape = 'u32[144,128]{1,0:T(1,128)}', space=vmem, size = 0x12000, scoped, tag = 'internal scratch']
  #allocation2 [shape = 'f32[16,32]{1,0:T(8,128)}', space=vmem, size = 0x2000, scoped, tag = 'scratch operand']
  %s0 = inlined_call_operand.vmem [shape: bf16[2,8,32], index: 0, kind: input, shape index: {}]
  %s1 = inlined_call_operand.vmem [shape: f32[8,32], index: 1, kind: input, shape index: {}]
  %s2 = inlined_call_operand.vmem [shape: bf16[2,32,96], index: 2, kind: input, shape index: {}]
  %s3 = inlined_call_operand.vmem [shape: f32[2,1,96], index: 3, kind: input, shape index: {}]
  %s4 = inlined_call_operand.vmem [shape: bf16[2,32,32], index: 4, kind: input, shape index: {}]
  %s5 = inlined_call_operand.vmem [shape: f32[2,1,32], index: 5, kind: input, shape index: {}]
  %s6 = inlined_call_operand.vmem [shape: bf16[2,32,64], index: 6, kind: input, shape index: {}]
  %s7 = inlined_call_operand.vmem [shape: f32[2,1,64], index: 7, kind: input, shape index: {}]
  %s8 = inlined_call_operand.vmem [shape: bf16[2,64,32], index: 8, kind: input, shape index: {}]
  %s9 = inlined_call_operand.vmem [shape: f32[2,1,32], index: 9, kind: input, shape index: {}]
  %s10 = inlined_call_operand.vmem [shape: f32[2,1,32], index: 10, kind: input, shape index: {}]
  %s11 = inlined_call_operand.vmem [shape: f32[2,1,32], index: 11, kind: input, shape index: {}]
  %s12 = inlined_call_operand.vmem [shape: f32[2,1,32], index: 12, kind: input, shape index: {}]
  %s13 = inlined_call_operand.vmem [shape: f32[2,1,32], index: 13, kind: input, shape index: {}]
  %s14 = inlined_call_operand.vmem [shape: f32[16,32], index: 14, kind: output, shape index: {}]
  %s15 = sld [smem:[#allocation0]]
  $region93: #{transformer_net_forward.2} parent=0
    _
  %s17 = ssub.s32 1, %s15
  %s18 = scalar_select 0, %s17, %s15
  loop: start=0, step=1, limit=4
  $region2: #{transformer_net_forward.2} parent=0 // loop_pre_header
    _
  $region3: #{transformer_net_forward.2} parent=0 // loop_header
    %s20 = sphi 0, %s24
    %p21 = scmp.ge.s32.totalorder %s20, 4
    %s28 = sphi 0, %s28
    %s30 = sphi 0, %s28
    %s31 = sphi 0, %s30
    %s45 = sphi 0, %s31
    %s49 = sphi 0, %s49
    %s51 = sphi 0, %s49
    %s52 = sphi 0, %s51
    %s66 = sphi 0, %s52
    %s72 = sphi 0, %s74
    %s75 = sphi 0, %s72
    %s76 = sphi 0, %s75
    %s92 = sphi 0, %s76
    %s98 = sphi 0, %s100
    %s101 = sphi 0, %s98
    %s102 = sphi 0, %s101
    %s118 = sphi 0, %s102
    %s124 = sphi 0, %s126
    %s127 = sphi 0, %s124
    %s128 = sphi 0, %s127
    %s144 = sphi 0, %s128
    %s150 = sphi 0, %s152
    %s153 = sphi 0, %s150
    %s154 = sphi 0, %s153
    %s170 = sphi 0, %s154
    %s176 = sphi 0, %s178
    %s179 = sphi 0, %s176
    %s180 = sphi 0, %s179
    %s196 = sphi 0, %s180
    %s202 = sphi 0, %s204
    %s205 = sphi 0, %s202
    %s206 = sphi 0, %s205
    %s222 = sphi 0, %s206
    %s228 = sphi 0, %s230
    %s231 = sphi 0, %s228
    %s232 = sphi 0, %s231
    %s248 = sphi 0, %s232
    %s254 = sphi 0, %s256
    %s257 = sphi 0, %s254
    %s258 = sphi 0, %s257
    %s274 = sphi 0, %s258
    %s280 = sphi 0, %s282
    %s283 = sphi 0, %s280
    %s284 = sphi 0, %s283
    %s300 = sphi 0, %s284
    %s306 = sphi 0, %s308
    %s309 = sphi 0, %s306
    %s310 = sphi 0, %s309
    %s326 = sphi 0, %s310
    %s332 = sphi 0, %s334
    %s335 = sphi 0, %s332
    %s336 = sphi 0, %s335
    %s352 = sphi 0, %s336
    %s358 = sphi 0, %s360
    %s361 = sphi 0, %s358
    %s362 = sphi 0, %s361
    %s378 = sphi 0, %s362
    %s382 = sphi 0, %s382
    %s384 = sphi 0, %s382
    %s385 = sphi 0, %s384
    %s399 = sphi 0, %s385
  $region4: #{transformer_net_forward.2} parent=0 // loop_header_branch
    %23 = sbr.rel (%p21) target = $region8
  $region5: #{transformer_net_forward.2} parent=0 // loop_body
    %s25 = ssub.s32 %s20, 1
    %s26 = ssub.s32 %s20, 2
    %s27 = sadd.s32 %s20, 1
    %s29 = sadd.s32 %s28, 1
    %p32 = scmp.eq.s32.totalorder %s20, 1
    %p33 = scmp.ne.s32.totalorder %s28, %s30
    %p34 = scmp.eq.s32.totalorder %s20, 0
    %p35 = por %p33, %p34
    %p36 = scmp.ne.s32.totalorder %s28, %s30
    %p37 = scmp.eq.s32.totalorder %s25, 1
    %p38 = por %p36, %p37
    %p39 = scmp.ne.s32.totalorder %s30, %s31
    %p40 = scmp.eq.s32.totalorder %s25, 0
    %p41 = por %p39, %p40
    %p42 = scmp.ne.s32.totalorder %s30, %s31
    %p43 = scmp.eq.s32.totalorder %s26, 1
    %p44 = por %p42, %p43
    %p46 = scmp.ne.s32.totalorder %s31, %s45
    %p47 = scmp.eq.s32.totalorder %s26, 0
    %p48 = por %p46, %p47
    %s50 = sadd.s32 %s49, 1
    %p53 = scmp.eq.s32.totalorder %s20, 1
    %p54 = scmp.ne.s32.totalorder %s49, %s51
    %p55 = scmp.eq.s32.totalorder %s20, 0
    %p56 = por %p54, %p55
    %p57 = scmp.ne.s32.totalorder %s49, %s51
    %p58 = scmp.eq.s32.totalorder %s25, 1
    %p59 = por %p57, %p58
    %p60 = scmp.ne.s32.totalorder %s51, %s52
    %p61 = scmp.eq.s32.totalorder %s25, 0
    %p62 = por %p60, %p61
    %p63 = scmp.ne.s32.totalorder %s51, %s52
    %p64 = scmp.eq.s32.totalorder %s26, 1
    %p65 = por %p63, %p64
    %p67 = scmp.ne.s32.totalorder %s52, %s66
    %p68 = scmp.eq.s32.totalorder %s26, 0
    %p69 = por %p67, %p68
    %s70 = ssub.s32 %s20, %s27
    %p71 = scmp.eq.s32.totalorder %s70, 0
    %s73 = sadd.s32 %s72, 1
    %s74 = scalar_select %p71, %s72, %s73
    %p77 = pneg %p71
    %p78 = scmp.eq.s32.totalorder %s20, 1
    %p79 = por %p77, %p78
    %p80 = scmp.ne.s32.totalorder %s72, %s75
    %p81 = scmp.eq.s32.totalorder %s20, 0
    %p82 = por %p80, %p81
    %p83 = scmp.ne.s32.totalorder %s72, %s75
    %p84 = scmp.eq.s32.totalorder %s25, 1
    %p85 = por %p83, %p84
    %p86 = scmp.ne.s32.totalorder %s75, %s76
    %p87 = scmp.eq.s32.totalorder %s25, 0
    %p88 = por %p86, %p87
    %p89 = scmp.ne.s32.totalorder %s75, %s76
    %p90 = scmp.eq.s32.totalorder %s26, 1
    %p91 = por %p89, %p90
    %p93 = scmp.ne.s32.totalorder %s76, %s92
    %p94 = scmp.eq.s32.totalorder %s26, 0
    %p95 = por %p93, %p94
    %s96 = ssub.s32 %s20, %s27
    %p97 = scmp.eq.s32.totalorder %s96, 0
    %s99 = sadd.s32 %s98, 1
    %s100 = scalar_select %p97, %s98, %s99
    %p103 = pneg %p97
    %p104 = scmp.eq.s32.totalorder %s20, 1
    %p105 = por %p103, %p104
    %p106 = scmp.ne.s32.totalorder %s98, %s101
    %p107 = scmp.eq.s32.totalorder %s20, 0
    %p108 = por %p106, %p107
    %p109 = scmp.ne.s32.totalorder %s98, %s101
    %p110 = scmp.eq.s32.totalorder %s25, 1
    %p111 = por %p109, %p110
    %p112 = scmp.ne.s32.totalorder %s101, %s102
    %p113 = scmp.eq.s32.totalorder %s25, 0
    %p114 = por %p112, %p113
    %p115 = scmp.ne.s32.totalorder %s101, %s102
    %p116 = scmp.eq.s32.totalorder %s26, 1
    %p117 = por %p115, %p116
    %p119 = scmp.ne.s32.totalorder %s102, %s118
    %p120 = scmp.eq.s32.totalorder %s26, 0
    %p121 = por %p119, %p120
    %s122 = ssub.s32 %s20, %s27
    %p123 = scmp.eq.s32.totalorder %s122, 0
    %s125 = sadd.s32 %s124, 1
    %s126 = scalar_select %p123, %s124, %s125
    %p129 = pneg %p123
    %p130 = scmp.eq.s32.totalorder %s20, 1
    %p131 = por %p129, %p130
    %p132 = scmp.ne.s32.totalorder %s124, %s127
    %p133 = scmp.eq.s32.totalorder %s20, 0
    %p134 = por %p132, %p133
    %p135 = scmp.ne.s32.totalorder %s124, %s127
    %p136 = scmp.eq.s32.totalorder %s25, 1
    %p137 = por %p135, %p136
    %p138 = scmp.ne.s32.totalorder %s127, %s128
    %p139 = scmp.eq.s32.totalorder %s25, 0
    %p140 = por %p138, %p139
    %p141 = scmp.ne.s32.totalorder %s127, %s128
    %p142 = scmp.eq.s32.totalorder %s26, 1
    %p143 = por %p141, %p142
    %p145 = scmp.ne.s32.totalorder %s128, %s144
    %p146 = scmp.eq.s32.totalorder %s26, 0
    %p147 = por %p145, %p146
    %s148 = ssub.s32 %s20, %s27
    %p149 = scmp.eq.s32.totalorder %s148, 0
    %s151 = sadd.s32 %s150, 1
    %s152 = scalar_select %p149, %s150, %s151
    %p155 = pneg %p149
    %p156 = scmp.eq.s32.totalorder %s20, 1
    %p157 = por %p155, %p156
    %p158 = scmp.ne.s32.totalorder %s150, %s153
    %p159 = scmp.eq.s32.totalorder %s20, 0
    %p160 = por %p158, %p159
    %p161 = scmp.ne.s32.totalorder %s150, %s153
    %p162 = scmp.eq.s32.totalorder %s25, 1
    %p163 = por %p161, %p162
    %p164 = scmp.ne.s32.totalorder %s153, %s154
    %p165 = scmp.eq.s32.totalorder %s25, 0
    %p166 = por %p164, %p165
    %p167 = scmp.ne.s32.totalorder %s153, %s154
    %p168 = scmp.eq.s32.totalorder %s26, 1
    %p169 = por %p167, %p168
    %p171 = scmp.ne.s32.totalorder %s154, %s170
    %p172 = scmp.eq.s32.totalorder %s26, 0
    %p173 = por %p171, %p172
    %s174 = ssub.s32 %s20, %s27
    %p175 = scmp.eq.s32.totalorder %s174, 0
    %s177 = sadd.s32 %s176, 1
    %s178 = scalar_select %p175, %s176, %s177
    %p181 = pneg %p175
    %p182 = scmp.eq.s32.totalorder %s20, 1
    %p183 = por %p181, %p182
    %p184 = scmp.ne.s32.totalorder %s176, %s179
    %p185 = scmp.eq.s32.totalorder %s20, 0
    %p186 = por %p184, %p185
    %p187 = scmp.ne.s32.totalorder %s176, %s179
    %p188 = scmp.eq.s32.totalorder %s25, 1
    %p189 = por %p187, %p188
    %p190 = scmp.ne.s32.totalorder %s179, %s180
    %p191 = scmp.eq.s32.totalorder %s25, 0
    %p192 = por %p190, %p191
    %p193 = scmp.ne.s32.totalorder %s179, %s180
    %p194 = scmp.eq.s32.totalorder %s26, 1
    %p195 = por %p193, %p194
    %p197 = scmp.ne.s32.totalorder %s180, %s196
    %p198 = scmp.eq.s32.totalorder %s26, 0
    %p199 = por %p197, %p198
    %s200 = ssub.s32 %s20, %s27
    %p201 = scmp.eq.s32.totalorder %s200, 0
    %s203 = sadd.s32 %s202, 1
    %s204 = scalar_select %p201, %s202, %s203
    %p207 = pneg %p201
    %p208 = scmp.eq.s32.totalorder %s20, 1
    %p209 = por %p207, %p208
    %p210 = scmp.ne.s32.totalorder %s202, %s205
    %p211 = scmp.eq.s32.totalorder %s20, 0
    %p212 = por %p210, %p211
    %p213 = scmp.ne.s32.totalorder %s202, %s205
    %p214 = scmp.eq.s32.totalorder %s25, 1
    %p215 = por %p213, %p214
    %p216 = scmp.ne.s32.totalorder %s205, %s206
    %p217 = scmp.eq.s32.totalorder %s25, 0
    %p218 = por %p216, %p217
    %p219 = scmp.ne.s32.totalorder %s205, %s206
    %p220 = scmp.eq.s32.totalorder %s26, 1
    %p221 = por %p219, %p220
    %p223 = scmp.ne.s32.totalorder %s206, %s222
    %p224 = scmp.eq.s32.totalorder %s26, 0
    %p225 = por %p223, %p224
    %s226 = ssub.s32 %s20, %s27
    %p227 = scmp.eq.s32.totalorder %s226, 0
    %s229 = sadd.s32 %s228, 1
    %s230 = scalar_select %p227, %s228, %s229
    %p233 = pneg %p227
    %p234 = scmp.eq.s32.totalorder %s20, 1
    %p235 = por %p233, %p234
    %p236 = scmp.ne.s32.totalorder %s228, %s231
    %p237 = scmp.eq.s32.totalorder %s20, 0
    %p238 = por %p236, %p237
    %p239 = scmp.ne.s32.totalorder %s228, %s231
    %p240 = scmp.eq.s32.totalorder %s25, 1
    %p241 = por %p239, %p240
    %p242 = scmp.ne.s32.totalorder %s231, %s232
    %p243 = scmp.eq.s32.totalorder %s25, 0
    %p244 = por %p242, %p243
    %p245 = scmp.ne.s32.totalorder %s231, %s232
    %p246 = scmp.eq.s32.totalorder %s26, 1
    %p247 = por %p245, %p246
    %p249 = scmp.ne.s32.totalorder %s232, %s248
    %p250 = scmp.eq.s32.totalorder %s26, 0
    %p251 = por %p249, %p250
    %s252 = ssub.s32 %s20, %s27
    %p253 = scmp.eq.s32.totalorder %s252, 0
    %s255 = sadd.s32 %s254, 1
    %s256 = scalar_select %p253, %s254, %s255
    %p259 = pneg %p253
    %p260 = scmp.eq.s32.totalorder %s20, 1
    %p261 = por %p259, %p260
    %p262 = scmp.ne.s32.totalorder %s254, %s257
    %p263 = scmp.eq.s32.totalorder %s20, 0
    %p264 = por %p262, %p263
    %p265 = scmp.ne.s32.totalorder %s254, %s257
    %p266 = scmp.eq.s32.totalorder %s25, 1
    %p267 = por %p265, %p266
    %p268 = scmp.ne.s32.totalorder %s257, %s258
    %p269 = scmp.eq.s32.totalorder %s25, 0
    %p270 = por %p268, %p269
    %p271 = scmp.ne.s32.totalorder %s257, %s258
    %p272 = scmp.eq.s32.totalorder %s26, 1
    %p273 = por %p271, %p272
    %p275 = scmp.ne.s32.totalorder %s258, %s274
    %p276 = scmp.eq.s32.totalorder %s26, 0
    %p277 = por %p275, %p276
    %s278 = ssub.s32 %s20, %s27
    %p279 = scmp.eq.s32.totalorder %s278, 0
    %s281 = sadd.s32 %s280, 1
    %s282 = scalar_select %p279, %s280, %s281
    %p285 = pneg %p279
    %p286 = scmp.eq.s32.totalorder %s20, 1
    %p287 = por %p285, %p286
    %p288 = scmp.ne.s32.totalorder %s280, %s283
    %p289 = scmp.eq.s32.totalorder %s20, 0
    %p290 = por %p288, %p289
    %p291 = scmp.ne.s32.totalorder %s280, %s283
    %p292 = scmp.eq.s32.totalorder %s25, 1
    %p293 = por %p291, %p292
    %p294 = scmp.ne.s32.totalorder %s283, %s284
    %p295 = scmp.eq.s32.totalorder %s25, 0
    %p296 = por %p294, %p295
    %p297 = scmp.ne.s32.totalorder %s283, %s284
    %p298 = scmp.eq.s32.totalorder %s26, 1
    %p299 = por %p297, %p298
    %p301 = scmp.ne.s32.totalorder %s284, %s300
    %p302 = scmp.eq.s32.totalorder %s26, 0
    %p303 = por %p301, %p302
    %s304 = ssub.s32 %s20, %s27
    %p305 = scmp.eq.s32.totalorder %s304, 0
    %s307 = sadd.s32 %s306, 1
    %s308 = scalar_select %p305, %s306, %s307
    %p311 = pneg %p305
    %p312 = scmp.eq.s32.totalorder %s20, 1
    %p313 = por %p311, %p312
    %p314 = scmp.ne.s32.totalorder %s306, %s309
    %p315 = scmp.eq.s32.totalorder %s20, 0
    %p316 = por %p314, %p315
    %p317 = scmp.ne.s32.totalorder %s306, %s309
    %p318 = scmp.eq.s32.totalorder %s25, 1
    %p319 = por %p317, %p318
    %p320 = scmp.ne.s32.totalorder %s309, %s310
    %p321 = scmp.eq.s32.totalorder %s25, 0
    %p322 = por %p320, %p321
    %p323 = scmp.ne.s32.totalorder %s309, %s310
    %p324 = scmp.eq.s32.totalorder %s26, 1
    %p325 = por %p323, %p324
    %p327 = scmp.ne.s32.totalorder %s310, %s326
    %p328 = scmp.eq.s32.totalorder %s26, 0
    %p329 = por %p327, %p328
    %s330 = ssub.s32 %s20, %s27
    %p331 = scmp.eq.s32.totalorder %s330, 0
    %s333 = sadd.s32 %s332, 1
    %s334 = scalar_select %p331, %s332, %s333
    %p337 = pneg %p331
    %p338 = scmp.eq.s32.totalorder %s20, 1
    %p339 = por %p337, %p338
    %p340 = scmp.ne.s32.totalorder %s332, %s335
    %p341 = scmp.eq.s32.totalorder %s20, 0
    %p342 = por %p340, %p341
    %p343 = scmp.ne.s32.totalorder %s332, %s335
    %p344 = scmp.eq.s32.totalorder %s25, 1
    %p345 = por %p343, %p344
    %p346 = scmp.ne.s32.totalorder %s335, %s336
    %p347 = scmp.eq.s32.totalorder %s25, 0
    %p348 = por %p346, %p347
    %p349 = scmp.ne.s32.totalorder %s335, %s336
    %p350 = scmp.eq.s32.totalorder %s26, 1
    %p351 = por %p349, %p350
    %p353 = scmp.ne.s32.totalorder %s336, %s352
    %p354 = scmp.eq.s32.totalorder %s26, 0
    %p355 = por %p353, %p354
    %s356 = ssub.s32 %s20, %s27
    %p357 = scmp.eq.s32.totalorder %s356, 0
    %s359 = sadd.s32 %s358, 1
    %s360 = scalar_select %p357, %s358, %s359
    %p363 = pneg %p357
    %p364 = scmp.eq.s32.totalorder %s20, 1
    %p365 = por %p363, %p364
    %p366 = scmp.ne.s32.totalorder %s358, %s361
    %p367 = scmp.eq.s32.totalorder %s20, 0
    %p368 = por %p366, %p367
    %p369 = scmp.ne.s32.totalorder %s358, %s361
    %p370 = scmp.eq.s32.totalorder %s25, 1
    %p371 = por %p369, %p370
    %p372 = scmp.ne.s32.totalorder %s361, %s362
    %p373 = scmp.eq.s32.totalorder %s25, 0
    %p374 = por %p372, %p373
    %p375 = scmp.ne.s32.totalorder %s361, %s362
    %p376 = scmp.eq.s32.totalorder %s26, 1
    %p377 = por %p375, %p376
    %p379 = scmp.ne.s32.totalorder %s362, %s378
    %p380 = scmp.eq.s32.totalorder %s26, 0
    %p381 = por %p379, %p380
    %s383 = sadd.s32 %s382, 1
    %p386 = scmp.eq.s32.totalorder %s20, 1
    %p387 = scmp.ne.s32.totalorder %s382, %s384
    %p388 = scmp.eq.s32.totalorder %s20, 0
    %p389 = por %p387, %p388
    %p390 = scmp.ne.s32.totalorder %s382, %s384
    %p391 = scmp.eq.s32.totalorder %s25, 1
    %p392 = por %p390, %p391
    %p393 = scmp.ne.s32.totalorder %s384, %s385
    %p394 = scmp.eq.s32.totalorder %s25, 0
    %p395 = por %p393, %p394
    %p396 = scmp.ne.s32.totalorder %s384, %s385
    %p397 = scmp.eq.s32.totalorder %s26, 1
    %p398 = por %p396, %p397
    %p400 = scmp.ne.s32.totalorder %s385, %s399
    %p401 = scmp.eq.s32.totalorder %s26, 0
    %p402 = por %p400, %p401
    %p403 = scmp.le.s32.totalorder 1, %s20
    %p404 = scmp.lt.s32.totalorder %s20, 3
    %p405 = pnand %p403, %p404
    %p406 = pneg %p405
    // Predicated region
    $region9: #{transformer_net_forward.2} parent=5 // pred_check
      _
    $region10: #{transformer_net_forward.2} parent=5 // pred_check_branch
      %408 = sbr.rel (%p405) target = $region12
    $region11: #{transformer_net_forward.2} parent=5 // pred_region
      %s409 = ssub.s32 %s20, 1
      // Predicated region
      $region13: #{transformer_net_forward.2} parent=11 // pred_check
        %p410 = pneg %p41
      $region14: #{transformer_net_forward.2} parent=11 // pred_check_branch
        %412 = sbr.rel (%p410) target = $region16
      $region15: #{transformer_net_forward.2} parent=11 // pred_region
        _
      $region16: #{transformer_net_forward.2} parent=11 // pred_fallthru
        _
      // Predicated region
      $region17: #{transformer_net_forward.2} parent=11 // pred_check
        %p413 = pneg %p62
      $region18: #{transformer_net_forward.2} parent=11 // pred_check_branch
        %415 = sbr.rel (%p413) target = $region20
      $region19: #{transformer_net_forward.2} parent=11 // pred_region
        _
      $region20: #{transformer_net_forward.2} parent=11 // pred_fallthru
        _
    $region12: #{transformer_net_forward.2} parent=5 // pred_fallthru
      _
    %p416 = scmp.lt.s32.totalorder %s20, 2
    // Predicated region
    $region21: #{transformer_net_forward.2} parent=5 // pred_check
      %p417 = pneg %p416
    $region22: #{transformer_net_forward.2} parent=5 // pred_check_branch
      %419 = sbr.rel (%p417) target = $region24
    $region23: #{transformer_net_forward.2} parent=5 // pred_region
      // Predicated region
      $region25: #{transformer_net_forward.2} parent=23 // pred_check
        %p420 = pneg %p82
      $region26: #{transformer_net_forward.2} parent=23 // pred_check_branch
        %422 = sbr.rel (%p420) target = $region28
      $region27: #{transformer_net_forward.2} parent=23 // pred_region
        %p423 = scmp.lt.s32.totalorder %s20, 1
        %s424 = scalar_select %p423, %s20, 1
        %s425 = smul.addr %s424, 4
        %s426 = smul.addr %s425, 4
        %s427 = scalar_lea.vmem %s2, %s426
      $region28: #{transformer_net_forward.2} parent=23 // pred_fallthru
        _
      // Predicated region
      $region29: #{transformer_net_forward.2} parent=23 // pred_check
        %p428 = pneg %p108
      $region30: #{transformer_net_forward.2} parent=23 // pred_check_branch
        %430 = sbr.rel (%p428) target = $region32
      $region31: #{transformer_net_forward.2} parent=23 // pred_region
        %p431 = scmp.lt.s32.totalorder %s20, 1
        %s432 = scalar_select %p431, %s20, 1
        %s433 = scalar_lea.vmem %s3, %s432
      $region32: #{transformer_net_forward.2} parent=23 // pred_fallthru
        _
      // Predicated region
      $region33: #{transformer_net_forward.2} parent=23 // pred_check
        %p434 = pneg %p134
      $region34: #{transformer_net_forward.2} parent=23 // pred_check_branch
        %436 = sbr.rel (%p434) target = $region36
      $region35: #{transformer_net_forward.2} parent=23 // pred_region
        %p437 = scmp.lt.s32.totalorder %s20, 1
        %s438 = scalar_select %p437, %s20, 1
        %s439 = smul.addr %s438, 4
        %s440 = smul.addr %s439, 4
        %s441 = scalar_lea.vmem %s4, %s440
      $region36: #{transformer_net_forward.2} parent=23 // pred_fallthru
        _
      // Predicated region
      $region37: #{transformer_net_forward.2} parent=23 // pred_check
        %p442 = pneg %p160
      $region38: #{transformer_net_forward.2} parent=23 // pred_check_branch
        %444 = sbr.rel (%p442) target = $region40
      $region39: #{transformer_net_forward.2} parent=23 // pred_region
        %p445 = scmp.lt.s32.totalorder %s20, 1
        %s446 = scalar_select %p445, %s20, 1
        %s447 = scalar_lea.vmem %s5, %s446
      $region40: #{transformer_net_forward.2} parent=23 // pred_fallthru
        _
      // Predicated region
      $region41: #{transformer_net_forward.2} parent=23 // pred_check
        %p448 = pneg %p186
      $region42: #{transformer_net_forward.2} parent=23 // pred_check_branch
        %450 = sbr.rel (%p448) target = $region44
      $region43: #{transformer_net_forward.2} parent=23 // pred_region
        %p451 = scmp.lt.s32.totalorder %s20, 1
        %s452 = scalar_select %p451, %s20, 1
        %s453 = smul.addr %s452, 4
        %s454 = smul.addr %s453, 4
        %s455 = scalar_lea.vmem %s6, %s454
      $region44: #{transformer_net_forward.2} parent=23 // pred_fallthru
        _
      // Predicated region
      $region45: #{transformer_net_forward.2} parent=23 // pred_check
        %p456 = pneg %p212
      $region46: #{transformer_net_forward.2} parent=23 // pred_check_branch
        %458 = sbr.rel (%p456) target = $region48
      $region47: #{transformer_net_forward.2} parent=23 // pred_region
        %p459 = scmp.lt.s32.totalorder %s20, 1
        %s460 = scalar_select %p459, %s20, 1
        %s461 = scalar_lea.vmem %s7, %s460
      $region48: #{transformer_net_forward.2} parent=23 // pred_fallthru
        _
      // Predicated region
      $region49: #{transformer_net_forward.2} parent=23 // pred_check
        %p462 = pneg %p238
      $region50: #{transformer_net_forward.2} parent=23 // pred_check_branch
        %464 = sbr.rel (%p462) target = $region52
      $region51: #{transformer_net_forward.2} parent=23 // pred_region
        %p465 = scmp.lt.s32.totalorder %s20, 1
        %s466 = scalar_select %p465, %s20, 1
        %s467 = smul.addr %s466, 8
        %s468 = smul.addr %s467, 4
        %s469 = scalar_lea.vmem %s8, %s468
      $region52: #{transformer_net_forward.2} parent=23 // pred_fallthru
        _
      // Predicated region
      $region53: #{transformer_net_forward.2} parent=23 // pred_check
        %p470 = pneg %p264
      $region54: #{transformer_net_forward.2} parent=23 // pred_check_branch
        %472 = sbr.rel (%p470) target = $region56
      $region55: #{transformer_net_forward.2} parent=23 // pred_region
        %p473 = scmp.lt.s32.totalorder %s20, 1
        %s474 = scalar_select %p473, %s20, 1
        %s475 = scalar_lea.vmem %s9, %s474
      $region56: #{transformer_net_forward.2} parent=23 // pred_fallthru
        _
      // Predicated region
      $region57: #{transformer_net_forward.2} parent=23 // pred_check
        %p476 = pneg %p290
      $region58: #{transformer_net_forward.2} parent=23 // pred_check_branch
        %478 = sbr.rel (%p476) target = $region60
      $region59: #{transformer_net_forward.2} parent=23 // pred_region
        %p479 = scmp.lt.s32.totalorder %s20, 1
        %s480 = scalar_select %p479, %s20, 1
        %s481 = scalar_lea.vmem %s10, %s480
      $region60: #{transformer_net_forward.2} parent=23 // pred_fallthru
        _
      // Predicated region
      $region61: #{transformer_net_forward.2} parent=23 // pred_check
        %p482 = pneg %p316
      $region62: #{transformer_net_forward.2} parent=23 // pred_check_branch
        %484 = sbr.rel (%p482) target = $region64
      $region63: #{transformer_net_forward.2} parent=23 // pred_region
        %p485 = scmp.lt.s32.totalorder %s20, 1
        %s486 = scalar_select %p485, %s20, 1
        %s487 = scalar_lea.vmem %s11, %s486
      $region64: #{transformer_net_forward.2} parent=23 // pred_fallthru
        _
      // Predicated region
      $region65: #{transformer_net_forward.2} parent=23 // pred_check
        %p488 = pneg %p342
      $region66: #{transformer_net_forward.2} parent=23 // pred_check_branch
        %490 = sbr.rel (%p488) target = $region68
      $region67: #{transformer_net_forward.2} parent=23 // pred_region
        %p491 = scmp.lt.s32.totalorder %s20, 1
        %s492 = scalar_select %p491, %s20, 1
        %s493 = scalar_lea.vmem %s12, %s492
      $region68: #{transformer_net_forward.2} parent=23 // pred_fallthru
        _
      // Predicated region
      $region69: #{transformer_net_forward.2} parent=23 // pred_check
        %p494 = pneg %p368
      $region70: #{transformer_net_forward.2} parent=23 // pred_check_branch
        %496 = sbr.rel (%p494) target = $region72
      $region71: #{transformer_net_forward.2} parent=23 // pred_region
        %p497 = scmp.lt.s32.totalorder %s20, 1
        %s498 = scalar_select %p497, %s20, 1
        %s499 = scalar_lea.vmem %s13, %s498
      $region72: #{transformer_net_forward.2} parent=23 // pred_fallthru
        _
    $region24: #{transformer_net_forward.2} parent=5 // pred_fallthru
      _
    %p500 = scmp.le.s32.totalorder 1, %s20
    %p501 = scmp.lt.s32.totalorder %s20, 3
    %p502 = pnand %p500, %p501
    %p503 = pneg %p502
    // Predicated region
    $region73: #{transformer_net_forward.2} parent=5 // pred_check
      _
    $region74: #{transformer_net_forward.2} parent=5 // pred_check_branch
      %505 = sbr.rel (%p502) target = $region76
    $region75: #{transformer_net_forward.2} parent=5 // pred_region
      %s506 = ssub.s32 %s20, 1
      %p507 = pneg %p41
      %p508 = pneg %p38
      %p509 = pneg %p62
      %p510 = pneg %p59
      %p511 = scmp.lt.s32.totalorder %s25, 1
      %s512 = scalar_select %p511, %s25, 1
      %s513 = smul.addr %s512, 4
      %s514 = smul.addr %s513, 4
      %s515 = scalar_lea.vmem %s2, %s514
      %p516 = pneg %p88
      %p517 = pneg %p85
      %p518 = scmp.lt.s32.totalorder %s25, 1
      %s519 = scalar_select %p518, %s25, 1
      %s520 = scalar_lea.vmem %s3, %s519
      %p521 = pneg %p114
      %p522 = pneg %p111
      %p523 = scmp.lt.s32.totalorder %s25, 1
      %s524 = scalar_select %p523, %s25, 1
      %s525 = smul.addr %s524, 4
      %s526 = smul.addr %s525, 4
      %s527 = scalar_lea.vmem %s4, %s526
      %p528 = pneg %p140
      %p529 = pneg %p137
      %p530 = scmp.lt.s32.totalorder %s25, 1
      %s531 = scalar_select %p530, %s25, 1
      %s532 = scalar_lea.vmem %s5, %s531
      %p533 = pneg %p166
      %p534 = pneg %p163
      %p535 = scmp.lt.s32.totalorder %s25, 1
      %s536 = scalar_select %p535, %s25, 1
      %s537 = smul.addr %s536, 4
      %s538 = smul.addr %s537, 4
      %s539 = scalar_lea.vmem %s6, %s538
      %p540 = pneg %p192
      %p541 = pneg %p189
      %p542 = scmp.lt.s32.totalorder %s25, 1
      %s543 = scalar_select %p542, %s25, 1
      %s544 = scalar_lea.vmem %s7, %s543
      %p545 = pneg %p218
      %p546 = pneg %p215
      %p547 = scmp.lt.s32.totalorder %s25, 1
      %s548 = scalar_select %p547, %s25, 1
      %s549 = smul.addr %s548, 8
      %s550 = smul.addr %s549, 4
      %s551 = scalar_lea.vmem %s8, %s550
      %p552 = pneg %p244
      %p553 = pneg %p241
      %p554 = scmp.lt.s32.totalorder %s25, 1
      %s555 = scalar_select %p554, %s25, 1
      %s556 = scalar_lea.vmem %s9, %s555
      %p557 = pneg %p270
      %p558 = pneg %p267
      %p559 = scmp.lt.s32.totalorder %s25, 1
      %s560 = scalar_select %p559, %s25, 1
      %s561 = scalar_lea.vmem %s10, %s560
      %p562 = pneg %p296
      %p563 = pneg %p293
      %p564 = scmp.lt.s32.totalorder %s25, 1
      %s565 = scalar_select %p564, %s25, 1
      %s566 = scalar_lea.vmem %s11, %s565
      %p567 = pneg %p322
      %p568 = pneg %p319
      %p569 = scmp.lt.s32.totalorder %s25, 1
      %s570 = scalar_select %p569, %s25, 1
      %s571 = scalar_lea.vmem %s12, %s570
      %p572 = pneg %p348
      %p573 = pneg %p345
      %p574 = scmp.lt.s32.totalorder %s25, 1
      %s575 = scalar_select %p574, %s25, 1
      %s576 = scalar_lea.vmem %s13, %s575
      %p577 = pneg %p374
      %p578 = pneg %p371
      %p579 = pneg %p395
      %p580 = pneg %p392
      %p581 = scmp.lt.s32.totalorder %s25, 1
      %s582 = scalar_select %p581, %s25, 1
      %s583 = smul.addr %s582, 4
      %s584 = smul.addr %s583, 4
      %s585 = scalar_lea.vmem %s2, %s584
      %p586 = scmp.lt.s32.totalorder %s25, 1
      %s587 = scalar_select %p586, %s25, 1
      %s588 = scalar_lea.vmem %s3, %s587
      %p589 = scmp.lt.s32.totalorder %s25, 1
      %s590 = scalar_select %p589, %s25, 1
      %s591 = smul.addr %s590, 4
      %s592 = smul.addr %s591, 4
      %s593 = scalar_lea.vmem %s4, %s592
      %p594 = scmp.lt.s32.totalorder %s25, 1
      %s595 = scalar_select %p594, %s25, 1
      %s596 = scalar_lea.vmem %s5, %s595
      %p597 = scmp.lt.s32.totalorder %s25, 1
      %s598 = scalar_select %p597, %s25, 1
      %s599 = smul.addr %s598, 4
      %s600 = smul.addr %s599, 4
      %s601 = scalar_lea.vmem %s6, %s600
      %p602 = scmp.lt.s32.totalorder %s25, 1
      %s603 = scalar_select %p602, %s25, 1
      %s604 = scalar_lea.vmem %s7, %s603
      %p605 = scmp.lt.s32.totalorder %s25, 1
      %s606 = scalar_select %p605, %s25, 1
      %s607 = smul.addr %s606, 8
      %s608 = smul.addr %s607, 4
      %s609 = scalar_lea.vmem %s8, %s608
      %p610 = scmp.lt.s32.totalorder %s25, 1
      %s611 = scalar_select %p610, %s25, 1
      %s612 = scalar_lea.vmem %s9, %s611
      %p613 = scmp.lt.s32.totalorder %s25, 1
      %s614 = scalar_select %p613, %s25, 1
      %s615 = scalar_lea.vmem %s10, %s614
      %p616 = scmp.lt.s32.totalorder %s25, 1
      %s617 = scalar_select %p616, %s25, 1
      %s618 = scalar_lea.vmem %s11, %s617
      %p619 = scmp.lt.s32.totalorder %s25, 1
      %s620 = scalar_select %p619, %s25, 1
      %s621 = scalar_lea.vmem %s12, %s620
      %p622 = scmp.lt.s32.totalorder %s25, 1
      %s623 = scalar_select %p622, %s25, 1
      %s624 = scalar_lea.vmem %s13, %s623
      %p626 = scmp.eq.s32.totalorder %s25, 0
      // Predicated region
      $region77: #{transformer_net_forward.2} parent=75 // pred_check
        %p627 = pneg %p626
      $region78: #{transformer_net_forward.2} parent=75 // pred_check_branch
        %629 = sbr.rel (%p627) target = $region80
      $region79: #{transformer_net_forward.2} parent=75 // pred_region
        %v630 = vld [vmem:[%s0] sm:$0xf]
        %v631 = vld [vmem:[%s0 + $0x4] sm:$0xf]
        %v632 = vunpack.c.l.bf16 %v630
        %v633 = vunpack.c.l.bf16 %v631
        %v634 = vld [vmem:[%s1] sm:$0xff]
        %v635 = vadd.f32 %v632, %v634
        %v636 = vadd.f32 %v633, %v634
        %vm637 = vcmask 261120
        %638 = vst.msk [vmem:[%s14] sm:$0xff] %vm637, %v635
        %639 = vst.msk [vmem:[%s14 + $0x8] sm:$0xff] %vm637, %v636
      $region80: #{transformer_net_forward.2} parent=75 // pred_fallthru
        _
      %v640 = vld [vmem:[%s14] sm:$0xff]
      %v641 = vld [vmem:[%s14 + $0x8] sm:$0xff]
      %v642 = vpack.c.bf16 %v641, %v640
      %v643 = vld [vmem:[%s585] sm:$0xf]
      %v644 = vld [vmem:[%s585 + $0x4] sm:$0xf]
      %v645 = vld [vmem:[%s585 + $0x8] sm:$0xf]
      %v646 = vld [vmem:[%s585 + $0xc] sm:$0xf]
      %v647 = vld [vmem:[%s588] sm:$0x1]
      %v649 = vlaneseq
      %v650 = vshrl.u32 %v649, 7
      %v651 = vsub.s32 0, %v650
      %v652 = vrot.slane %v647, %v651
      %v658 = vunpack.c.l.b16 %v643
      %v659 = vunpack.c.l.b16 %v644
      %v660 = vunpack.c.l.b16 %v645
      %v661 = vunpack.c.l.b16 %v646
      %v662 = vpack.c.b16 %v659, %v658
      %v663 = vpack.c.b16 %v661, %v660
      %vm666 = vcmask 261120
      %v668 = vsel %vm666, %v642, 0
      %670 = vmatprep.subr.bf16.mxu0 0
      %671 = vmatpush1.bf16.msra.mxu0 %v662
      %672 = vmatprep.subr.bf16.mxu0 0
      %673 = vmatpush1.bf16.msra.mxu0 %v663
      %674 = vmatprep.subr.bf16.mxu0 0
      %675 = vmatpush1.bf16.msra.mxu0 0
      %676 = vmatprep.subr.bf16.mxu0 0
      %677 = vmatpush1.bf16.msra.mxu0 0
      %678 = vmatprep.subr.bf16.mxu0 0
      %679 = vmatpush1.bf16.msra.mxu0 0
      %680 = vmatprep.subr.bf16.mxu0 0
      %681 = vmatpush1.bf16.msra.mxu0 0
      %682 = vmatprep.subr.bf16.mxu0 0
      %683 = vmatpush1.bf16.msra.mxu0 0
      %684 = vmatprep.subr.bf16.mxu0 0
      %685 = vmatpush1.bf16.msra.mxu0 0
      %686 = vmatprep.subr.bf16.mxu0 0
      %687 = vmatpush1.bf16.msra.mxu0 0
      %688 = vmatprep.subr.bf16.mxu0 0
      %689 = vmatpush1.bf16.msra.mxu0 0
      %690 = vmatprep.subr.bf16.mxu0 0
      %691 = vmatpush1.bf16.msra.mxu0 0
      %692 = vmatprep.subr.bf16.mxu0 0
      %693 = vmatpush1.bf16.msra.mxu0 0
      %694 = vmatprep.subr.bf16.mxu0 0
      %695 = vmatpush1.bf16.msra.mxu0 0
      %696 = vmatprep.subr.bf16.mxu0 0
      %697 = vmatpush1.bf16.msra.mxu0 0
      %698 = vmatprep.subr.bf16.mxu0 0
      %699 = vmatpush1.bf16.msra.mxu0 0
      %700 = vmatprep.subr.bf16.mxu0 0
      %701 = vmatpush1.bf16.msra.mxu0 0
      %702 = vmatprep.mubr.bf16.mxu0 0
      %703 = vmatmul.mubr.bf16.gmra.mrb[0].mxu0 %v668
      %v704 = vpop.f32.mrb[0].mxu0
      %v705 = vadd.f32 %v652, %v704
      %v706 = vpop.f32.mrb[0].mxu0
      %v707 = vpop.f32.mrb[0].mxu0
      %v708 = vadd.f32 %v652, %v707
      %v709 = vpop.f32.mrb[0].mxu0
      %710 = vdwg.mxu0
      %v711 = vpack.c.bf16 %v708, %v705
      %v712 = vlaneseq
      %v713 = vshrl.u32 %v712, 7
      %v714 = vlaneseq
      %v715 = vand.u32 %v714, 127
      %vm716 = vcmp.gt.s32.totalorder %v715, %v713
      %v718 = vunpack.c.l.b16 %v711
      %v719 = vunpack.c.h.b16 %v711
      %v720 = vpack.c.b16 %v718, %v718
      %v721 = vpack.c.b16 %v719, %v719
      %722 = vrot.lane.b32.xlu0 %v720, 96
      %v723 = vpop.permute.xlu0 %722
      %vm724 = vcmask 64512
      %v726 = vsel %vm724, %v720, 0
      %v729 = vsel %vm724, %v723, 0
      %731 = vmatprep.subr.bf16.mxu0 0
      %732 = vmatpush1.bf16.xpose.msra.mxu0 %v729
      %733 = vmatprep.subr.bf16.mxu0 0
      %734 = vmatpush1.bf16.xpose.msra.mxu0 0
      %735 = vmatprep.subr.bf16.mxu0 0
      %736 = vmatpush1.bf16.xpose.msra.mxu0 0
      %737 = vmatprep.subr.bf16.mxu0 0
      %738 = vmatpush1.bf16.xpose.msra.mxu0 0
      %739 = vmatprep.subr.bf16.mxu0 0
      %740 = vmatpush1.bf16.xpose.msra.mxu0 0
      %741 = vmatprep.subr.bf16.mxu0 0
      %742 = vmatpush1.bf16.xpose.msra.mxu0 0
      %743 = vmatprep.subr.bf16.mxu0 0
      %744 = vmatpush1.bf16.xpose.msra.mxu0 0
      %745 = vmatprep.subr.bf16.mxu0 0
      %746 = vmatpush1.bf16.xpose.msra.mxu0 0
      %747 = vmatprep.subr.bf16.mxu0 0
      %748 = vmatpush1.bf16.xpose.msra.mxu0 0
      %749 = vmatprep.subr.bf16.mxu0 0
      %750 = vmatpush1.bf16.xpose.msra.mxu0 0
      %751 = vmatprep.subr.bf16.mxu0 0
      %752 = vmatpush1.bf16.xpose.msra.mxu0 0
      %753 = vmatprep.subr.bf16.mxu0 0
      %754 = vmatpush1.bf16.xpose.msra.mxu0 0
      %755 = vmatprep.subr.bf16.mxu0 0
      %756 = vmatpush1.bf16.xpose.msra.mxu0 0
      %757 = vmatprep.subr.bf16.mxu0 0
      %758 = vmatpush1.bf16.xpose.msra.mxu0 0
      %759 = vmatprep.subr.bf16.mxu0 0
      %760 = vmatpush1.bf16.xpose.msra.mxu0 0
      %761 = vmatprep.subr.bf16.mxu0 0
      %762 = vmatpush1.bf16.xpose.msra.mxu0 0
      %763 = vmatprep.mubr.bf16.mxu0 0
      %764 = vmatmul.mubr.bf16.gmra.mrb[0].mxu0 %v726
      %v765 = vpop.f32.mrb[0].mxu0
      %v766 = vadd.f32 0.0, %v765
      %v767 = vpop.f32.mrb[0].mxu0
      %v768 = vpop.f32.mrb[0].mxu0
      %v769 = vpop.f32.mrb[0].mxu0
      %770 = vdwg.mxu0
      %771 = vrot.lane.b32.xlu0 %v721, 96
      %v772 = vpop.permute.xlu0 %771
      %v774 = vsel %vm724, %v721, 0
      %v777 = vsel %vm724, %v772, 0
      %779 = vmatprep.subr.bf16.mxu0 0
      %780 = vmatpush1.bf16.xpose.msra.mxu0 %v777
      %781 = vmatprep.subr.bf16.mxu0 0
      %782 = vmatpush1.bf16.xpose.msra.mxu0 0
      %783 = vmatprep.subr.bf16.mxu0 0
      %784 = vmatpush1.bf16.xpose.msra.mxu0 0
      %785 = vmatprep.subr.bf16.mxu0 0
      %786 = vmatpush1.bf16.xpose.msra.mxu0 0
      %787 = vmatprep.subr.bf16.mxu0 0
      %788 = vmatpush1.bf16.xpose.msra.mxu0 0
      %789 = vmatprep.subr.bf16.mxu0 0
      %790 = vmatpush1.bf16.xpose.msra.mxu0 0
      %791 = vmatprep.subr.bf16.mxu0 0
      %792 = vmatpush1.bf16.xpose.msra.mxu0 0
      %793 = vmatprep.subr.bf16.mxu0 0
      %794 = vmatpush1.bf16.xpose.msra.mxu0 0
      %795 = vmatprep.subr.bf16.mxu0 0
      %796 = vmatpush1.bf16.xpose.msra.mxu0 0
      %797 = vmatprep.subr.bf16.mxu0 0
      %798 = vmatpush1.bf16.xpose.msra.mxu0 0
      %799 = vmatprep.subr.bf16.mxu0 0
      %800 = vmatpush1.bf16.xpose.msra.mxu0 0
      %801 = vmatprep.subr.bf16.mxu0 0
      %802 = vmatpush1.bf16.xpose.msra.mxu0 0
      %803 = vmatprep.subr.bf16.mxu0 0
      %804 = vmatpush1.bf16.xpose.msra.mxu0 0
      %805 = vmatprep.subr.bf16.mxu0 0
      %806 = vmatpush1.bf16.xpose.msra.mxu0 0
      %807 = vmatprep.subr.bf16.mxu0 0
      %808 = vmatpush1.bf16.xpose.msra.mxu0 0
      %809 = vmatprep.subr.bf16.mxu0 0
      %810 = vmatpush1.bf16.xpose.msra.mxu0 0
      %811 = vmatprep.mubr.bf16.mxu0 0
      %812 = vmatmul.mubr.bf16.gmra.mrb[0].mxu0 %v774
      %v813 = vpop.f32.mrb[0].mxu0
      %v814 = vadd.f32 0.0, %v813
      %v815 = vpop.f32.mrb[0].mxu0
      %v816 = vpop.f32.mrb[0].mxu0
      %v817 = vpop.f32.mrb[0].mxu0
      %818 = vdwg.mxu0
      %v819 = vmul.f32 %v766, 0.35355338
      %v820 = vmul.f32 %v814, 0.35355338
      %v821 = vsel %vm716, 1, 0
      %vm822 = vcmp.eq.s32.totalorder %v821, 1
      %v823 = vsel %vm822, -1e+30, %v819
      %v824 = vsel %vm822, -1e+30, %v820
      %v825 = vsel %vm724, %v823, -inf
      %826 = vmax.xlane.f32.xlu0 %v825
      %v827 = vpop.xlane.xlu0 %826
      %v828 = vsel %vm724, %v824, -inf
      %829 = vmax.xlane.f32.xlu0 %v828
      %v830 = vpop.xlane.xlu0 %829
      %v831 = vsub.f32 %v823, %v827
      %v832 = vsub.f32 %v824, %v830
      %v833 = vmul.f32 %v831, 1.442695
      %v834 = vpow.pop %v833
      %v835 = vmul.f32 %v832, 1.442695
      %v836 = vpow.pop %v835
      %v837 = vsel %vm724, %v834, 0.0
      %838 = vadd.xlane.f32.xlu0 %v837
      %v839 = vpop.xlane.xlu0 %838
      %v840 = vsel %vm724, %v836, 0.0
      %841 = vadd.xlane.f32.xlu0 %v840
      %v842 = vpop.xlane.xlu0 %841
      %v843 = vrcp.pop %v839
      %v844 = vrcp.pop %v842
      %v845 = vmul.f32 %v834, %v843
      %v846 = vmul.f32 %v836, %v844
      %v847 = vpack.c.bf16 %v845, %v845
      %v848 = vpack.c.bf16 %v846, %v846
      %849 = vrot.lane.b32.xlu0 %v720, 64
      %v850 = vpop.permute.xlu0 %849
      %v852 = vsel %vm724, %v847, 0
      %vm854 = vcmask 1043456
      %v856 = vsel %vm854, %v850, 0
      %858 = vmatprep.subr.bf16.mxu0 0
      %859 = vmatpush1.bf16.msra.mxu0 %v856
      %860 = vmatprep.subr.bf16.mxu0 0
      %861 = vmatpush1.bf16.msra.mxu0 0
      %862 = vmatprep.subr.bf16.mxu0 0
      %863 = vmatpush1.bf16.msra.mxu0 0
      %864 = vmatprep.subr.bf16.mxu0 0
      %865 = vmatpush1.bf16.msra.mxu0 0
      %866 = vmatprep.subr.bf16.mxu0 0
      %867 = vmatpush1.bf16.msra.mxu0 0
      %868 = vmatprep.subr.bf16.mxu0 0
      %869 = vmatpush1.bf16.msra.mxu0 0
      %870 = vmatprep.subr.bf16.mxu0 0
      %871 = vmatpush1.bf16.msra.mxu0 0
      %872 = vmatprep.subr.bf16.mxu0 0
      %873 = vmatpush1.bf16.msra.mxu0 0
      %874 = vmatprep.subr.bf16.mxu0 0
      %875 = vmatpush1.bf16.msra.mxu0 0
      %876 = vmatprep.subr.bf16.mxu0 0
      %877 = vmatpush1.bf16.msra.mxu0 0
      %878 = vmatprep.subr.bf16.mxu0 0
      %879 = vmatpush1.bf16.msra.mxu0 0
      %880 = vmatprep.subr.bf16.mxu0 0
      %881 = vmatpush1.bf16.msra.mxu0 0
      %882 = vmatprep.subr.bf16.mxu0 0
      %883 = vmatpush1.bf16.msra.mxu0 0
      %884 = vmatprep.subr.bf16.mxu0 0
      %885 = vmatpush1.bf16.msra.mxu0 0
      %886 = vmatprep.subr.bf16.mxu0 0
      %887 = vmatpush1.bf16.msra.mxu0 0
      %888 = vmatprep.subr.bf16.mxu0 0
      %889 = vmatpush1.bf16.msra.mxu0 0
      %890 = vmatprep.mubr.bf16.mxu0 0
      %891 = vmatmul.mubr.bf16.gmra.mrb[0].mxu0 %v852
      %v892 = vpop.f32.mrb[0].mxu0
      %v893 = vadd.f32 0.0, %v892
      %v894 = vpop.f32.mrb[0].mxu0
      %v895 = vpop.f32.mrb[0].mxu0
      %v896 = vpop.f32.mrb[0].mxu0
      %897 = vdwg.mxu0
      %898 = vrot.lane.b32.xlu0 %v721, 64
      %v899 = vpop.permute.xlu0 %898
      %v901 = vsel %vm724, %v848, 0
      %v904 = vsel %vm854, %v899, 0
      %906 = vmatprep.subr.bf16.mxu0 0
      %907 = vmatpush1.bf16.msra.mxu0 %v904
      %908 = vmatprep.subr.bf16.mxu0 0
      %909 = vmatpush1.bf16.msra.mxu0 0
      %910 = vmatprep.subr.bf16.mxu0 0
      %911 = vmatpush1.bf16.msra.mxu0 0
      %912 = vmatprep.subr.bf16.mxu0 0
      %913 = vmatpush1.bf16.msra.mxu0 0
      %914 = vmatprep.subr.bf16.mxu0 0
      %915 = vmatpush1.bf16.msra.mxu0 0
      %916 = vmatprep.subr.bf16.mxu0 0
      %917 = vmatpush1.bf16.msra.mxu0 0
      %918 = vmatprep.subr.bf16.mxu0 0
      %919 = vmatpush1.bf16.msra.mxu0 0
      %920 = vmatprep.subr.bf16.mxu0 0
      %921 = vmatpush1.bf16.msra.mxu0 0
      %922 = vmatprep.subr.bf16.mxu0 0
      %923 = vmatpush1.bf16.msra.mxu0 0
      %924 = vmatprep.subr.bf16.mxu0 0
      %925 = vmatpush1.bf16.msra.mxu0 0
      %926 = vmatprep.subr.bf16.mxu0 0
      %927 = vmatpush1.bf16.msra.mxu0 0
      %928 = vmatprep.subr.bf16.mxu0 0
      %929 = vmatpush1.bf16.msra.mxu0 0
      %930 = vmatprep.subr.bf16.mxu0 0
      %931 = vmatpush1.bf16.msra.mxu0 0
      %932 = vmatprep.subr.bf16.mxu0 0
      %933 = vmatpush1.bf16.msra.mxu0 0
      %934 = vmatprep.subr.bf16.mxu0 0
      %935 = vmatpush1.bf16.msra.mxu0 0
      %936 = vmatprep.subr.bf16.mxu0 0
      %937 = vmatpush1.bf16.msra.mxu0 0
      %938 = vmatprep.mubr.bf16.mxu0 0
      %939 = vmatmul.mubr.bf16.gmra.mrb[0].mxu0 %v901
      %v940 = vpop.f32.mrb[0].mxu0
      %v941 = vadd.f32 0.0, %v940
      %v942 = vpop.f32.mrb[0].mxu0
      %v943 = vpop.f32.mrb[0].mxu0
      %v944 = vpop.f32.mrb[0].mxu0
      %945 = vdwg.mxu0
      %946 = vst.msk [vmem:[#allocation2] sm:$0xff] %vm724, %v893
      %947 = vst.msk [vmem:[#allocation2 + $0x8] sm:$0xff] %vm724, %v941
      %948 = vrot.lane.b32.xlu0 %v720, 120
      %v949 = vpop.permute.xlu0 %948
      %950 = vrot.lane.b32.xlu0 %v720, 88
      %v951 = vpop.permute.xlu0 %950
      %v953 = vsel %vm724, %v949, 0
      %v956 = vsel %vm724, %v951, 0
      %958 = vmatprep.subr.bf16.mxu0 0
      %959 = vmatpush1.bf16.xpose.msra.mxu0 %v956
      %960 = vmatprep.subr.bf16.mxu0 0
      %961 = vmatpush1.bf16.xpose.msra.mxu0 0
      %962 = vmatprep.subr.bf16.mxu0 0
      %963 = vmatpush1.bf16.xpose.msra.mxu0 0
      %964 = vmatprep.subr.bf16.mxu0 0
      %965 = vmatpush1.bf16.xpose.msra.mxu0 0
      %966 = vmatprep.subr.bf16.mxu0 0
      %967 = vmatpush1.bf16.xpose.msra.mxu0 0
      %968 = vmatprep.subr.bf16.mxu0 0
      %969 = vmatpush1.bf16.xpose.msra.mxu0 0
      %970 = vmatprep.subr.bf16.mxu0 0
      %971 = vmatpush1.bf16.xpose.msra.mxu0 0
      %972 = vmatprep.subr.bf16.mxu0 0
      %973 = vmatpush1.bf16.xpose.msra.mxu0 0
      %974 = vmatprep.subr.bf16.mxu0 0
      %975 = vmatpush1.bf16.xpose.msra.mxu0 0
      %976 = vmatprep.subr.bf16.mxu0 0
      %977 = vmatpush1.bf16.xpose.msra.mxu0 0
      %978 = vmatprep.subr.bf16.mxu0 0
      %979 = vmatpush1.bf16.xpose.msra.mxu0 0
      %980 = vmatprep.subr.bf16.mxu0 0
      %981 = vmatpush1.bf16.xpose.msra.mxu0 0
      %982 = vmatprep.subr.bf16.mxu0 0
      %983 = vmatpush1.bf16.xpose.msra.mxu0 0
      %984 = vmatprep.subr.bf16.mxu0 0
      %985 = vmatpush1.bf16.xpose.msra.mxu0 0
      %986 = vmatprep.subr.bf16.mxu0 0
      %987 = vmatpush1.bf16.xpose.msra.mxu0 0
      %988 = vmatprep.subr.bf16.mxu0 0
      %989 = vmatpush1.bf16.xpose.msra.mxu0 0
      %990 = vmatprep.mubr.bf16.mxu0 0
      %991 = vmatmul.mubr.bf16.gmra.mrb[0].mxu0 %v953
      %v992 = vpop.f32.mrb[0].mxu0
      %v993 = vadd.f32 0.0, %v992
      %v994 = vpop.f32.mrb[0].mxu0
      %v995 = vpop.f32.mrb[0].mxu0
      %v996 = vpop.f32.mrb[0].mxu0
      %997 = vdwg.mxu0
      %998 = vrot.lane.b32.xlu0 %v721, 120
      %v999 = vpop.permute.xlu0 %998
      %1000 = vrot.lane.b32.xlu0 %v721, 88
      %v1001 = vpop.permute.xlu0 %1000
      %v1003 = vsel %vm724, %v999, 0
      %v1006 = vsel %vm724, %v1001, 0
      %1008 = vmatprep.subr.bf16.mxu0 0
      %1009 = vmatpush1.bf16.xpose.msra.mxu0 %v1006
      %1010 = vmatprep.subr.bf16.mxu0 0
      %1011 = vmatpush1.bf16.xpose.msra.mxu0 0
      %1012 = vmatprep.subr.bf16.mxu0 0
      %1013 = vmatpush1.bf16.xpose.msra.mxu0 0
      %1014 = vmatprep.subr.bf16.mxu0 0
      %1015 = vmatpush1.bf16.xpose.msra.mxu0 0
      %1016 = vmatprep.subr.bf16.mxu0 0
      %1017 = vmatpush1.bf16.xpose.msra.mxu0 0
      %1018 = vmatprep.subr.bf16.mxu0 0
      %1019 = vmatpush1.bf16.xpose.msra.mxu0 0
      %1020 = vmatprep.subr.bf16.mxu0 0
      %1021 = vmatpush1.bf16.xpose.msra.mxu0 0
      %1022 = vmatprep.subr.bf16.mxu0 0
      %1023 = vmatpush1.bf16.xpose.msra.mxu0 0
      %1024 = vmatprep.subr.bf16.mxu0 0
      %1025 = vmatpush1.bf16.xpose.msra.mxu0 0
      %1026 = vmatprep.subr.bf16.mxu0 0
      %1027 = vmatpush1.bf16.xpose.msra.mxu0 0
      %1028 = vmatprep.subr.bf16.mxu0 0
      %1029 = vmatpush1.bf16.xpose.msra.mxu0 0
      %1030 = vmatprep.subr.bf16.mxu0 0
      %1031 = vmatpush1.bf16.xpose.msra.mxu0 0
      %1032 = vmatprep.subr.bf16.mxu0 0
      %1033 = vmatpush1.bf16.xpose.msra.mxu0 0
      %1034 = vmatprep.subr.bf16.mxu0 0
      %1035 = vmatpush1.bf16.xpose.msra.mxu0 0
      %1036 = vmatprep.subr.bf16.mxu0 0
      %1037 = vmatpush1.bf16.xpose.msra.mxu0 0
      %1038 = vmatprep.subr.bf16.mxu0 0
      %1039 = vmatpush1.bf16.xpose.msra.mxu0 0
      %1040 = vmatprep.mubr.bf16.mxu0 0
      %1041 = vmatmul.mubr.bf16.gmra.mrb[0].mxu0 %v1003
      %v1042 = vpop.f32.mrb[0].mxu0
      %v1043 = vadd.f32 0.0, %v1042
      %v1044 = vpop.f32.mrb[0].mxu0
      %v1045 = vpop.f32.mrb[0].mxu0
      %v1046 = vpop.f32.mrb[0].mxu0
      %1047 = vdwg.mxu0
      %v1048 = vmul.f32 %v993, 0.35355338
      %v1049 = vmul.f32 %v1043, 0.35355338
      %v1050 = vsel %vm822, -1e+30, %v1048
      %v1051 = vsel %vm822, -1e+30, %v1049
      %v1052 = vsel %vm724, %v1050, -inf
      %1053 = vmax.xlane.f32.xlu0 %v1052
      %v1054 = vpop.xlane.xlu0 %1053
      %v1055 = vsel %vm724, %v1051, -inf
      %1056 = vmax.xlane.f32.xlu0 %v1055
      %v1057 = vpop.xlane.xlu0 %1056
      %v1058 = vsub.f32 %v1050, %v1054
      %v1059 = vsub.f32 %v1051, %v1057
      %v1060 = vmul.f32 %v1058, 1.442695
      %v1061 = vpow.pop %v1060
      %v1062 = vmul.f32 %v1059, 1.442695
      %v1063 = vpow.pop %v1062
      %v1064 = vsel %vm724, %v1061, 0.0
      %1065 = vadd.xlane.f32.xlu0 %v1064
      %v1066 = vpop.xlane.xlu0 %1065
      %v1067 = vsel %vm724, %v1063, 0.0
      %1068 = vadd.xlane.f32.xlu0 %v1067
      %v1069 = vpop.xlane.xlu0 %1068
      %v1070 = vrcp.pop %v1066
      %v1071 = vrcp.pop %v1069
      %v1072 = vmul.f32 %v1061, %v1070
      %v1073 = vmul.f32 %v1063, %v1071
      %v1074 = vpack.c.bf16 %v1072, %v1072
      %v1075 = vpack.c.bf16 %v1073, %v1073
      %1076 = vrot.lane.b32.xlu0 %v720, 56
      %v1077 = vpop.permute.xlu0 %1076
      %v1079 = vsel %vm724, %v1074, 0
      %v1082 = vsel %vm854, %v1077, 0
      %1084 = vmatprep.subr.bf16.mxu0 0
      %1085 = vmatpush1.bf16.msra.mxu0 %v1082
      %1086 = vmatprep.subr.bf16.mxu0 0
      %1087 = vmatpush1.bf16.msra.mxu0 0
      %1088 = vmatprep.subr.bf16.mxu0 0
      %1089 = vmatpush1.bf16.msra.mxu0 0
      %1090 = vmatprep.subr.bf16.mxu0 0
      %1091 = vmatpush1.bf16.msra.mxu0 0
      %1092 = vmatprep.subr.bf16.mxu0 0
      %1093 = vmatpush1.bf16.msra.mxu0 0
      %1094 = vmatprep.subr.bf16.mxu0 0
      %1095 = vmatpush1.bf16.msra.mxu0 0
      %1096 = vmatprep.subr.bf16.mxu0 0
      %1097 = vmatpush1.bf16.msra.mxu0 0
      %1098 = vmatprep.subr.bf16.mxu0 0
      %1099 = vmatpush1.bf16.msra.mxu0 0
      %1100 = vmatprep.subr.bf16.mxu0 0
      %1101 = vmatpush1.bf16.msra.mxu0 0
      %1102 = vmatprep.subr.bf16.mxu0 0
      %1103 = vmatpush1.bf16.msra.mxu0 0
      %1104 = vmatprep.subr.bf16.mxu0 0
      %1105 = vmatpush1.bf16.msra.mxu0 0
      %1106 = vmatprep.subr.bf16.mxu0 0
      %1107 = vmatpush1.bf16.msra.mxu0 0
      %1108 = vmatprep.subr.bf16.mxu0 0
      %1109 = vmatpush1.bf16.msra.mxu0 0
      %1110 = vmatprep.subr.bf16.mxu0 0
      %1111 = vmatpush1.bf16.msra.mxu0 0
      %1112 = vmatprep.subr.bf16.mxu0 0
      %1113 = vmatpush1.bf16.msra.mxu0 0
      %1114 = vmatprep.subr.bf16.mxu0 0
      %1115 = vmatpush1.bf16.msra.mxu0 0
      %1116 = vmatprep.mubr.bf16.mxu0 0
      %1117 = vmatmul.mubr.bf16.gmra.mrb[0].mxu0 %v1079
      %v1118 = vpop.f32.mrb[0].mxu0
      %v1119 = vadd.f32 0.0, %v1118
      %v1120 = vpop.f32.mrb[0].mxu0
      %v1121 = vpop.f32.mrb[0].mxu0
      %v1122 = vpop.f32.mrb[0].mxu0
      %1123 = vdwg.mxu0
      %1124 = vrot.lane.b32.xlu0 %v721, 56
      %v1125 = vpop.permute.xlu0 %1124
      %v1127 = vsel %vm724, %v1075, 0
      %v1130 = vsel %vm854, %v1125, 0
      %1132 = vmatprep.subr.bf16.mxu0 0
      %1133 = vmatpush1.bf16.msra.mxu0 %v1130
      %1134 = vmatprep.subr.bf16.mxu0 0
      %1135 = vmatpush1.bf16.msra.mxu0 0
      %1136 = vmatprep.subr.bf16.mxu0 0
      %1137 = vmatpush1.bf16.msra.mxu0 0
      %1138 = vmatprep.subr.bf16.mxu0 0
      %1139 = vmatpush1.bf16.msra.mxu0 0
      %1140 = vmatprep.subr.bf16.mxu0 0
      %1141 = vmatpush1.bf16.msra.mxu0 0
      %1142 = vmatprep.subr.bf16.mxu0 0
      %1143 = vmatpush1.bf16.msra.mxu0 0
      %1144 = vmatprep.subr.bf16.mxu0 0
      %1145 = vmatpush1.bf16.msra.mxu0 0
      %1146 = vmatprep.subr.bf16.mxu0 0
      %1147 = vmatpush1.bf16.msra.mxu0 0
      %1148 = vmatprep.subr.bf16.mxu0 0
      %1149 = vmatpush1.bf16.msra.mxu0 0
      %1150 = vmatprep.subr.bf16.mxu0 0
      %1151 = vmatpush1.bf16.msra.mxu0 0
      %1152 = vmatprep.subr.bf16.mxu0 0
      %1153 = vmatpush1.bf16.msra.mxu0 0
      %1154 = vmatprep.subr.bf16.mxu0 0
      %1155 = vmatpush1.bf16.msra.mxu0 0
      %1156 = vmatprep.subr.bf16.mxu0 0
      %1157 = vmatpush1.bf16.msra.mxu0 0
      %1158 = vmatprep.subr.bf16.mxu0 0
      %1159 = vmatpush1.bf16.msra.mxu0 0
      %1160 = vmatprep.subr.bf16.mxu0 0
      %1161 = vmatpush1.bf16.msra.mxu0 0
      %1162 = vmatprep.subr.bf16.mxu0 0
      %1163 = vmatpush1.bf16.msra.mxu0 0
      %1164 = vmatprep.mubr.bf16.mxu0 0
      %1165 = vmatmul.mubr.bf16.gmra.mrb[0].mxu0 %v1127
      %v1166 = vpop.f32.mrb[0].mxu0
      %v1167 = vadd.f32 0.0, %v1166
      %v1168 = vpop.f32.mrb[0].mxu0
      %v1169 = vpop.f32.mrb[0].mxu0
      %v1170 = vpop.f32.mrb[0].mxu0
      %1171 = vdwg.mxu0
      %1174 = vrot.lane.b32.xlu0 %v1119, 8
      %v1175 = vpop.permute.xlu0 %1174
      %1176 = vrot.lane.b32.xlu0 %v1167, 8
      %v1177 = vpop.permute.xlu0 %1176
      %vm1180 = vcmask 130112
      %1181 = vst.msk [vmem:[#allocation2] sm:$0xff] %vm1180, %v1175
      %1182 = vst.msk [vmem:[#allocation2 + $0x8] sm:$0xff] %vm1180, %v1177
      %1183 = vrot.lane.b32.xlu0 %v720, 112
      %v1184 = vpop.permute.xlu0 %1183
      %1185 = vrot.lane.b32.xlu0 %v720, 80
      %v1186 = vpop.permute.xlu0 %1185
      %v1188 = vsel %vm724, %v1184, 0
      %v1191 = vsel %vm724, %v1186, 0
      %1193 = vmatprep.subr.bf16.mxu0 0
      %1194 = vmatpush1.bf16.xpose.msra.mxu0 %v1191
      %1195 = vmatprep.subr.bf16.mxu0 0
      %1196 = vmatpush1.bf16.xpose.msra.mxu0 0
      %1197 = vmatprep.subr.bf16.mxu0 0
      %1198 = vmatpush1.bf16.xpose.msra.mxu0 0
      %1199 = vmatprep.subr.bf16.mxu0 0
      %1200 = vmatpush1.bf16.xpose.msra.mxu0 0
      %1201 = vmatprep.subr.bf16.mxu0 0
      %1202 = vmatpush1.bf16.xpose.msra.mxu0 0
      %1203 = vmatprep.subr.bf16.mxu0 0
      %1204 = vmatpush1.bf16.xpose.msra.mxu0 0
      %1205 = vmatprep.subr.bf16.mxu0 0
      %1206 = vmatpush1.bf16.xpose.msra.mxu0 0
      %1207 = vmatprep.subr.bf16.mxu0 0
      %1208 = vmatpush1.bf16.xpose.msra.mxu0 0
      %1209 = vmatprep.subr.bf16.mxu0 0
      %1210 = vmatpush1.bf16.xpose.msra.mxu0 0
      %1211 = vmatprep.subr.bf16.mxu0 0
      %1212 = vmatpush1.bf16.xpose.msra.mxu0 0
      %1213 = vmatprep.subr.bf16.mxu0 0
      %1214 = vmatpush1.bf16.xpose.msra.mxu0 0
      %1215 = vmatprep.subr.bf16.mxu0 0
      %1216 = vmatpush1.bf16.xpose.msra.mxu0 0
      %1217 = vmatprep.subr.bf16.mxu0 0
      %1218 = vmatpush1.bf16.xpose.msra.mxu0 0
      %1219 = vmatprep.subr.bf16.mxu0 0
      %1220 = vmatpush1.bf16.xpose.msra.mxu0 0
      %1221 = vmatprep.subr.bf16.mxu0 0
      %1222 = vmatpush1.bf16.xpose.msra.mxu0 0
      %1223 = vmatprep.subr.bf16.mxu0 0
      %1224 = vmatpush1.bf16.xpose.msra.mxu0 0
      %1225 = vmatprep.mubr.bf16.mxu0 0
      %1226 = vmatmul.mubr.bf16.gmra.mrb[0].mxu0 %v1188
      %v1227 = vpop.f32.mrb[0].mxu0
      %v1228 = vadd.f32 0.0, %v1227
      %v1229 = vpop.f32.mrb[0].mxu0
      %v1230 = vpop.f32.mrb[0].mxu0
      %v1231 = vpop.f32.mrb[0].mxu0
      %1232 = vdwg.mxu0
      %1233 = vrot.lane.b32.xlu0 %v721, 112
      %v1234 = vpop.permute.xlu0 %1233
      %1235 = vrot.lane.b32.xlu0 %v721, 80
      %v1236 = vpop.permute.xlu0 %1235
      %v1238 = vsel %vm724, %v1234, 0
      %v1241 = vsel %vm724, %v1236, 0
      %1243 = vmatprep.subr.bf16.mxu0 0
      %1244 = vmatpush1.bf16.xpose.msra.mxu0 %v1241
      %1245 = vmatprep.subr.bf16.mxu0 0
      %1246 = vmatpush1.bf16.xpose.msra.mxu0 0
      %1247 = vmatprep.subr.bf16.mxu0 0
      %1248 = vmatpush1.bf16.xpose.msra.mxu0 0
      %1249 = vmatprep.subr.bf16.mxu0 0
      %1250 = vmatpush1.bf16.xpose.msra.mxu0 0
      %1251 = vmatprep.subr.bf16.mxu0 0
      %1252 = vmatpush1.bf16.xpose.msra.mxu0 0
      %1253 = vmatprep.subr.bf16.mxu0 0
      %1254 = vmatpush1.bf16.xpose.msra.mxu0 0
      %1255 = vmatprep.subr.bf16.mxu0 0
      %1256 = vmatpush1.bf16.xpose.msra.mxu0 0
      %1257 = vmatprep.subr.bf16.mxu0 0
      %1258 = vmatpush1.bf16.xpose.msra.mxu0 0
      %1259 = vmatprep.subr.bf16.mxu0 0
      %1260 = vmatpush1.bf16.xpose.msra.mxu0 0
      %1261 = vmatprep.subr.bf16.mxu0 0
      %1262 = vmatpush1.bf16.xpose.msra.mxu0 0
      %1263 = vmatprep.subr.bf16.mxu0 0
      %1264 = vmatpush1.bf16.xpose.msra.mxu0 0
      %1265 = vmatprep.subr.bf16.mxu0 0
      %1266 = vmatpush1.bf16.xpose.msra.mxu0 0
      %1267 = vmatprep.subr.bf16.mxu0 0
      %1268 = vmatpush1.bf16.xpose.msra.mxu0 0
      %1269 = vmatprep.subr.bf16.mxu0 0
      %1270 = vmatpush1.bf16.xpose.msra.mxu0 0
      %1271 = vmatprep.subr.bf16.mxu0 0
      %1272 = vmatpush1.bf16.xpose.msra.mxu0 0
      %1273 = vmatprep.subr.bf16.mxu0 0
      %1274 = vmatpush1.bf16.xpose.msra.mxu0 0
      %1275 = vmatprep.mubr.bf16.mxu0 0
      %1276 = vmatmul.mubr.bf16.gmra.mrb[0].mxu0 %v1238
      %v1277 = vpop.f32.mrb[0].mxu0
      %v1278 = vadd.f32 0.0, %v1277
      %v1279 = vpop.f32.mrb[0].mxu0
      %v1280 = vpop.f32.mrb[0].mxu0
      %v1281 = vpop.f32.mrb[0].mxu0
      %1282 = vdwg.mxu0
      %v1283 = vmul.f32 %v1228, 0.35355338
      %v1284 = vmul.f32 %v1278, 0.35355338
      %v1285 = vsel %vm822, -1e+30, %v1283
      %v1286 = vsel %vm822, -1e+30, %v1284
      %v1287 = vsel %vm724, %v1285, -inf
      %1288 = vmax.xlane.f32.xlu0 %v1287
      %v1289 = vpop.xlane.xlu0 %1288
      %v1290 = vsel %vm724, %v1286, -inf
      %1291 = vmax.xlane.f32.xlu0 %v1290
      %v1292 = vpop.xlane.xlu0 %1291
      %v1293 = vsub.f32 %v1285, %v1289
      %v1294 = vsub.f32 %v1286, %v1292
      %v1295 = vmul.f32 %v1293, 1.442695
      %v1296 = vpow.pop %v1295
      %v1297 = vmul.f32 %v1294, 1.442695
      %v1298 = vpow.pop %v1297
      %v1299 = vsel %vm724, %v1296, 0.0
      %1300 = vadd.xlane.f32.xlu0 %v1299
      %v1301 = vpop.xlane.xlu0 %1300
      %v1302 = vsel %vm724, %v1298, 0.0
      %1303 = vadd.xlane.f32.xlu0 %v1302
      %v1304 = vpop.xlane.xlu0 %1303
      %v1305 = vrcp.pop %v1301
      %v1306 = vrcp.pop %v1304
      %v1307 = vmul.f32 %v1296, %v1305
      %v1308 = vmul.f32 %v1298, %v1306
      %v1309 = vpack.c.bf16 %v1307, %v1307
      %v1310 = vpack.c.bf16 %v1308, %v1308
      %1311 = vrot.lane.b32.xlu0 %v720, 48
      %v1312 = vpop.permute.xlu0 %1311
      %v1314 = vsel %vm724, %v1309, 0
      %v1317 = vsel %vm854, %v1312, 0
      %1319 = vmatprep.subr.bf16.mxu0 0
      %1320 = vmatpush1.bf16.msra.mxu0 %v1317
      %1321 = vmatprep.subr.bf16.mxu0 0
      %1322 = vmatpush1.bf16.msra.mxu0 0
      %1323 = vmatprep.subr.bf16.mxu0 0
      %1324 = vmatpush1.bf16.msra.mxu0 0
      %1325 = vmatprep.subr.bf16.mxu0 0
      %1326 = vmatpush1.bf16.msra.mxu0 0
      %1327 = vmatprep.subr.bf16.mxu0 0
      %1328 = vmatpush1.bf16.msra.mxu0 0
      %1329 = vmatprep.subr.bf16.mxu0 0
      %1330 = vmatpush1.bf16.msra.mxu0 0
      %1331 = vmatprep.subr.bf16.mxu0 0
      %1332 = vmatpush1.bf16.msra.mxu0 0
      %1333 = vmatprep.subr.bf16.mxu0 0
      %1334 = vmatpush1.bf16.msra.mxu0 0
      %1335 = vmatprep.subr.bf16.mxu0 0
      %1336 = vmatpush1.bf16.msra.mxu0 0
      %1337 = vmatprep.subr.bf16.mxu0 0
      %1338 = vmatpush1.bf16.msra.mxu0 0
      %1339 = vmatprep.subr.bf16.mxu0 0
      %1340 = vmatpush1.bf16.msra.mxu0 0
      %1341 = vmatprep.subr.bf16.mxu0 0
      %1342 = vmatpush1.bf16.msra.mxu0 0
      %1343 = vmatprep.subr.bf16.mxu0 0
      %1344 = vmatpush1.bf16.msra.mxu0 0
      %1345 = vmatprep.subr.bf16.mxu0 0
      %1346 = vmatpush1.bf16.msra.mxu0 0
      %1347 = vmatprep.subr.bf16.mxu0 0
      %1348 = vmatpush1.bf16.msra.mxu0 0
      %1349 = vmatprep.subr.bf16.mxu0 0
      %1350 = vmatpush1.bf16.msra.mxu0 0
      %1351 = vmatprep.mubr.bf16.mxu0 0
      %1352 = vmatmul.mubr.bf16.gmra.mrb[0].mxu0 %v1314
      %v1353 = vpop.f32.mrb[0].mxu0
      %v1354 = vadd.f32 0.0, %v1353
      %v1355 = vpop.f32.mrb[0].mxu0
      %v1356 = vpop.f32.mrb[0].mxu0
      %v1357 = vpop.f32.mrb[0].mxu0
      %1358 = vdwg.mxu0
      %1359 = vrot.lane.b32.xlu0 %v721, 48
      %v1360 = vpop.permute.xlu0 %1359
      %v1362 = vsel %vm724, %v1310, 0
      %v1365 = vsel %vm854, %v1360, 0
      %1367 = vmatprep.subr.bf16.mxu0 0
      %1368 = vmatpush1.bf16.msra.mxu0 %v1365
      %1369 = vmatprep.subr.bf16.mxu0 0
      %1370 = vmatpush1.bf16.msra.mxu0 0
      %1371 = vmatprep.subr.bf16.mxu0 0
      %1372 = vmatpush1.bf16.msra.mxu0 0
      %1373 = vmatprep.subr.bf16.mxu0 0
      %1374 = vmatpush1.bf16.msra.mxu0 0
      %1375 = vmatprep.subr.bf16.mxu0 0
      %1376 = vmatpush1.bf16.msra.mxu0 0
      %1377 = vmatprep.subr.bf16.mxu0 0
      %1378 = vmatpush1.bf16.msra.mxu0 0
      %1379 = vmatprep.subr.bf16.mxu0 0
      %1380 = vmatpush1.bf16.msra.mxu0 0
      %1381 = vmatprep.subr.bf16.mxu0 0
      %1382 = vmatpush1.bf16.msra.mxu0 0
      %1383 = vmatprep.subr.bf16.mxu0 0
      %1384 = vmatpush1.bf16.msra.mxu0 0
      %1385 = vmatprep.subr.bf16.mxu0 0
      %1386 = vmatpush1.bf16.msra.mxu0 0
      %1387 = vmatprep.subr.bf16.mxu0 0
      %1388 = vmatpush1.bf16.msra.mxu0 0
      %1389 = vmatprep.subr.bf16.mxu0 0
      %1390 = vmatpush1.bf16.msra.mxu0 0
      %1391 = vmatprep.subr.bf16.mxu0 0
      %1392 = vmatpush1.bf16.msra.mxu0 0
      %1393 = vmatprep.subr.bf16.mxu0 0
      %1394 = vmatpush1.bf16.msra.mxu0 0
      %1395 = vmatprep.subr.bf16.mxu0 0
      %1396 = vmatpush1.bf16.msra.mxu0 0
      %1397 = vmatprep.subr.bf16.mxu0 0
      %1398 = vmatpush1.bf16.msra.mxu0 0
      %1399 = vmatprep.mubr.bf16.mxu0 0
      %1400 = vmatmul.mubr.bf16.gmra.mrb[0].mxu0 %v1362
      %v1401 = vpop.f32.mrb[0].mxu0
      %v1402 = vadd.f32 0.0, %v1401
      %v1403 = vpop.f32.mrb[0].mxu0
      %v1404 = vpop.f32.mrb[0].mxu0
      %v1405 = vpop.f32.mrb[0].mxu0
      %1406 = vdwg.mxu0
      %1409 = vrot.lane.b32.xlu0 %v1354, 16
      %v1410 = vpop.permute.xlu0 %1409
      %1411 = vrot.lane.b32.xlu0 %v1402, 16
      %v1412 = vpop.permute.xlu0 %1411
      %vm1415 = vcmask 195712
      %1416 = vst.msk [vmem:[#allocation2] sm:$0xff] %vm1415, %v1410
      %1417 = vst.msk [vmem:[#allocation2 + $0x8] sm:$0xff] %vm1415, %v1412
      %1418 = vrot.lane.b32.xlu0 %v720, 104
      %v1419 = vpop.permute.xlu0 %1418
      %1420 = vrot.lane.b32.xlu0 %v720, 72
      %v1421 = vpop.permute.xlu0 %1420
      %v1423 = vsel %vm724, %v1419, 0
      %v1426 = vsel %vm724, %v1421, 0
      %1428 = vmatprep.subr.bf16.mxu0 0
      %1429 = vmatpush1.bf16.xpose.msra.mxu0 %v1426
      %1430 = vmatprep.subr.bf16.mxu0 0
      %1431 = vmatpush1.bf16.xpose.msra.mxu0 0
      %1432 = vmatprep.subr.bf16.mxu0 0
      %1433 = vmatpush1.bf16.xpose.msra.mxu0 0
      %1434 = vmatprep.subr.bf16.mxu0 0
      %1435 = vmatpush1.bf16.xpose.msra.mxu0 0
      %1436 = vmatprep.subr.bf16.mxu0 0
      %1437 = vmatpush1.bf16.xpose.msra.mxu0 0
      %1438 = vmatprep.subr.bf16.mxu0 0
      %1439 = vmatpush1.bf16.xpose.msra.mxu0 0
      %1440 = vmatprep.subr.bf16.mxu0 0
      %1441 = vmatpush1.bf16.xpose.msra.mxu0 0
      %1442 = vmatprep.subr.bf16.mxu0 0
      %1443 = vmatpush1.bf16.xpose.msra.mxu0 0
      %1444 = vmatprep.subr.bf16.mxu0 0
      %1445 = vmatpush1.bf16.xpose.msra.mxu0 0
      %1446 = vmatprep.subr.bf16.mxu0 0
      %1447 = vmatpush1.bf16.xpose.msra.mxu0 0
      %1448 = vmatprep.subr.bf16.mxu0 0
      %1449 = vmatpush1.bf16.xpose.msra.mxu0 0
      %1450 = vmatprep.subr.bf16.mxu0 0
      %1451 = vmatpush1.bf16.xpose.msra.mxu0 0
      %1452 = vmatprep.subr.bf16.mxu0 0
      %1453 = vmatpush1.bf16.xpose.msra.mxu0 0
      %1454 = vmatprep.subr.bf16.mxu0 0
      %1455 = vmatpush1.bf16.xpose.msra.mxu0 0
      %1456 = vmatprep.subr.bf16.mxu0 0
      %1457 = vmatpush1.bf16.xpose.msra.mxu0 0
      %1458 = vmatprep.subr.bf16.mxu0 0
      %1459 = vmatpush1.bf16.xpose.msra.mxu0 0
      %1460 = vmatprep.mubr.bf16.mxu0 0
      %1461 = vmatmul.mubr.bf16.gmra.mrb[0].mxu0 %v1423
      %v1462 = vpop.f32.mrb[0].mxu0
      %v1463 = vadd.f32 0.0, %v1462
      %v1464 = vpop.f32.mrb[0].mxu0
      %v1465 = vpop.f32.mrb[0].mxu0
      %v1466 = vpop.f32.mrb[0].mxu0
      %1467 = vdwg.mxu0
      %1468 = vrot.lane.b32.xlu0 %v721, 104
      %v1469 = vpop.permute.xlu0 %1468
      %1470 = vrot.lane.b32.xlu0 %v721, 72
      %v1471 = vpop.permute.xlu0 %1470
      %v1473 = vsel %vm724, %v1469, 0
      %v1476 = vsel %vm724, %v1471, 0
      %1478 = vmatprep.subr.bf16.mxu0 0
      %1479 = vmatpush1.bf16.xpose.msra.mxu0 %v1476
      %1480 = vmatprep.subr.bf16.mxu0 0
      %1481 = vmatpush1.bf16.xpose.msra.mxu0 0
      %1482 = vmatprep.subr.bf16.mxu0 0
      %1483 = vmatpush1.bf16.xpose.msra.mxu0 0
      %1484 = vmatprep.subr.bf16.mxu0 0
      %1485 = vmatpush1.bf16.xpose.msra.mxu0 0
      %1486 = vmatprep.subr.bf16.mxu0 0
      %1487 = vmatpush1.bf16.xpose.msra.mxu0 0
      %1488 = vmatprep.subr.bf16.mxu0 0
      %1489 = vmatpush1.bf16.xpose.msra.mxu0 0
      %1490 = vmatprep.subr.bf16.mxu0 0
      %1491 = vmatpush1.bf16.xpose.msra.mxu0 0
      %1492 = vmatprep.subr.bf16.mxu0 0
      %1493 = vmatpush1.bf16.xpose.msra.mxu0 0
      %1494 = vmatprep.subr.bf16.mxu0 0
      %1495 = vmatpush1.bf16.xpose.msra.mxu0 0
      %1496 = vmatprep.subr.bf16.mxu0 0
      %1497 = vmatpush1.bf16.xpose.msra.mxu0 0
      %1498 = vmatprep.subr.bf16.mxu0 0
      %1499 = vmatpush1.bf16.xpose.msra.mxu0 0
      %1500 = vmatprep.subr.bf16.mxu0 0
      %1501 = vmatpush1.bf16.xpose.msra.mxu0 0
      %1502 = vmatprep.subr.bf16.mxu0 0
      %1503 = vmatpush1.bf16.xpose.msra.mxu0 0
      %1504 = vmatprep.subr.bf16.mxu0 0
      %1505 = vmatpush1.bf16.xpose.msra.mxu0 0
      %1506 = vmatprep.subr.bf16.mxu0 0
      %1507 = vmatpush1.bf16.xpose.msra.mxu0 0
      %1508 = vmatprep.subr.bf16.mxu0 0
      %1509 = vmatpush1.bf16.xpose.msra.mxu0 0
      %1510 = vmatprep.mubr.bf16.mxu0 0
      %1511 = vmatmul.mubr.bf16.gmra.mrb[0].mxu0 %v1473
      %v1512 = vpop.f32.mrb[0].mxu0
      %v1513 = vadd.f32 0.0, %v1512
      %v1514 = vpop.f32.mrb[0].mxu0
      %v1515 = vpop.f32.mrb[0].mxu0
      %v1516 = vpop.f32.mrb[0].mxu0
      %1517 = vdwg.mxu0
      %v1518 = vmul.f32 %v1463, 0.35355338
      %v1519 = vmul.f32 %v1513, 0.35355338
      %v1520 = vsel %vm822, -1e+30, %v1518
      %v1521 = vsel %vm822, -1e+30, %v1519
      %v1522 = vsel %vm724, %v1520, -inf
      %1523 = vmax.xlane.f32.xlu0 %v1522
      %v1524 = vpop.xlane.xlu0 %1523
      %v1525 = vsel %vm724, %v1521, -inf
      %1526 = vmax.xlane.f32.xlu0 %v1525
      %v1527 = vpop.xlane.xlu0 %1526
      %v1528 = vsub.f32 %v1520, %v1524
      %v1529 = vsub.f32 %v1521, %v1527
      %v1530 = vmul.f32 %v1528, 1.442695
      %v1531 = vpow.pop %v1530
      %v1532 = vmul.f32 %v1529, 1.442695
      %v1533 = vpow.pop %v1532
      %v1534 = vsel %vm724, %v1531, 0.0
      %1535 = vadd.xlane.f32.xlu0 %v1534
      %v1536 = vpop.xlane.xlu0 %1535
      %v1537 = vsel %vm724, %v1533, 0.0
      %1538 = vadd.xlane.f32.xlu0 %v1537
      %v1539 = vpop.xlane.xlu0 %1538
      %v1540 = vrcp.pop %v1536
      %v1541 = vrcp.pop %v1539
      %v1542 = vmul.f32 %v1531, %v1540
      %v1543 = vmul.f32 %v1533, %v1541
      %v1544 = vpack.c.bf16 %v1542, %v1542
      %v1545 = vpack.c.bf16 %v1543, %v1543
      %1546 = vrot.lane.b32.xlu0 %v720, 40
      %v1547 = vpop.permute.xlu0 %1546
      %v1549 = vsel %vm724, %v1544, 0
      %v1552 = vsel %vm854, %v1547, 0
      %1554 = vmatprep.subr.bf16.mxu0 0
      %1555 = vmatpush1.bf16.msra.mxu0 %v1552
      %1556 = vmatprep.subr.bf16.mxu0 0
      %1557 = vmatpush1.bf16.msra.mxu0 0
      %1558 = vmatprep.subr.bf16.mxu0 0
      %1559 = vmatpush1.bf16.msra.mxu0 0
      %1560 = vmatprep.subr.bf16.mxu0 0
      %1561 = vmatpush1.bf16.msra.mxu0 0
      %1562 = vmatprep.subr.bf16.mxu0 0
      %1563 = vmatpush1.bf16.msra.mxu0 0
      %1564 = vmatprep.subr.bf16.mxu0 0
      %1565 = vmatpush1.bf16.msra.mxu0 0
      %1566 = vmatprep.subr.bf16.mxu0 0
      %1567 = vmatpush1.bf16.msra.mxu0 0
      %1568 = vmatprep.subr.bf16.mxu0 0
      %1569 = vmatpush1.bf16.msra.mxu0 0
      %1570 = vmatprep.subr.bf16.mxu0 0
      %1571 = vmatpush1.bf16.msra.mxu0 0
      %1572 = vmatprep.subr.bf16.mxu0 0
      %1573 = vmatpush1.bf16.msra.mxu0 0
      %1574 = vmatprep.subr.bf16.mxu0 0
      %1575 = vmatpush1.bf16.msra.mxu0 0
      %1576 = vmatprep.subr.bf16.mxu0 0
      %1577 = vmatpush1.bf16.msra.mxu0 0
      %1578 = vmatprep.subr.bf16.mxu0 0
      %1579 = vmatpush1.bf16.msra.mxu0 0
      %1580 = vmatprep.subr.bf16.mxu0 0
      %1581 = vmatpush1.bf16.msra.mxu0 0
      %1582 = vmatprep.subr.bf16.mxu0 0
      %1583 = vmatpush1.bf16.msra.mxu0 0
      %1584 = vmatprep.subr.bf16.mxu0 0
      %1585 = vmatpush1.bf16.msra.mxu0 0
      %1586 = vmatprep.mubr.bf16.mxu0 0
      %1587 = vmatmul.mubr.bf16.gmra.mrb[0].mxu0 %v1549
      %v1588 = vpop.f32.mrb[0].mxu0
      %v1589 = vadd.f32 0.0, %v1588
      %v1590 = vpop.f32.mrb[0].mxu0
      %v1591 = vpop.f32.mrb[0].mxu0
      %v1592 = vpop.f32.mrb[0].mxu0
      %1593 = vdwg.mxu0
      %1594 = vrot.lane.b32.xlu0 %v721, 40
      %v1595 = vpop.permute.xlu0 %1594
      %v1597 = vsel %vm724, %v1545, 0
      %v1600 = vsel %vm854, %v1595, 0
      %1602 = vmatprep.subr.bf16.mxu0 0
      %1603 = vmatpush1.bf16.msra.mxu0 %v1600
      %1604 = vmatprep.subr.bf16.mxu0 0
      %1605 = vmatpush1.bf16.msra.mxu0 0
      %1606 = vmatprep.subr.bf16.mxu0 0
      %1607 = vmatpush1.bf16.msra.mxu0 0
      %1608 = vmatprep.subr.bf16.mxu0 0
      %1609 = vmatpush1.bf16.msra.mxu0 0
      %1610 = vmatprep.subr.bf16.mxu0 0
      %1611 = vmatpush1.bf16.msra.mxu0 0
      %1612 = vmatprep.subr.bf16.mxu0 0
      %1613 = vmatpush1.bf16.msra.mxu0 0
      %1614 = vmatprep.subr.bf16.mxu0 0
      %1615 = vmatpush1.bf16.msra.mxu0 0
      %1616 = vmatprep.subr.bf16.mxu0 0
      %1617 = vmatpush1.bf16.msra.mxu0 0
      %1618 = vmatprep.subr.bf16.mxu0 0
      %1619 = vmatpush1.bf16.msra.mxu0 0
      %1620 = vmatprep.subr.bf16.mxu0 0
      %1621 = vmatpush1.bf16.msra.mxu0 0
      %1622 = vmatprep.subr.bf16.mxu0 0
      %1623 = vmatpush1.bf16.msra.mxu0 0
      %1624 = vmatprep.subr.bf16.mxu0 0
      %1625 = vmatpush1.bf16.msra.mxu0 0
      %1626 = vmatprep.subr.bf16.mxu0 0
      %1627 = vmatpush1.bf16.msra.mxu0 0
      %1628 = vmatprep.subr.bf16.mxu0 0
      %1629 = vmatpush1.bf16.msra.mxu0 0
      %1630 = vmatprep.subr.bf16.mxu0 0
      %1631 = vmatpush1.bf16.msra.mxu0 0
      %1632 = vmatprep.subr.bf16.mxu0 0
      %1633 = vmatpush1.bf16.msra.mxu0 0
      %1634 = vmatprep.mubr.bf16.mxu0 0
      %1635 = vmatmul.mubr.bf16.gmra.mrb[0].mxu0 %v1597
      %v1636 = vpop.f32.mrb[0].mxu0
      %v1637 = vadd.f32 0.0, %v1636
      %v1638 = vpop.f32.mrb[0].mxu0
      %v1639 = vpop.f32.mrb[0].mxu0
      %v1640 = vpop.f32.mrb[0].mxu0
      %1641 = vdwg.mxu0
      %1644 = vrot.lane.b32.xlu0 %v1589, 24
      %v1645 = vpop.permute.xlu0 %1644
      %1646 = vrot.lane.b32.xlu0 %v1637, 24
      %v1647 = vpop.permute.xlu0 %1646
      %vm1650 = vcmask 261312
      %1651 = vst.msk [vmem:[#allocation2] sm:$0xff] %vm1650, %v1645
      %1652 = vst.msk [vmem:[#allocation2 + $0x8] sm:$0xff] %vm1650, %v1647
      %v1653 = vld [vmem:[#allocation2] sm:$0xff]
      %v1654 = vld [vmem:[#allocation2 + $0x8] sm:$0xff]
      %v1655 = vpack.c.bf16 %v1654, %v1653
      %v1656 = vld [vmem:[%s593] sm:$0xf]
      %v1657 = vld [vmem:[%s593 + $0x4] sm:$0xf]
      %v1658 = vld [vmem:[%s593 + $0x8] sm:$0xf]
      %v1659 = vld [vmem:[%s593 + $0xc] sm:$0xf]
      %v1660 = vld [vmem:[%s596] sm:$0x1]
      %v1662 = vlaneseq
      %v1663 = vshrl.u32 %v1662, 7
      %v1664 = vsub.s32 0, %v1663
      %v1665 = vrot.slane %v1660, %v1664
      %v1671 = vunpack.c.l.b16 %v1656
      %v1672 = vunpack.c.l.b16 %v1657
      %v1673 = vunpack.c.l.b16 %v1658
      %v1674 = vunpack.c.l.b16 %v1659
      %v1675 = vpack.c.b16 %v1672, %v1671
      %v1676 = vpack.c.b16 %v1674, %v1673
      %v1680 = vsel %vm666, %v1655, 0
      %1682 = vmatprep.subr.bf16.mxu0 0
      %1683 = vmatpush1.bf16.msra.mxu0 %v1675
      %1684 = vmatprep.subr.bf16.mxu0 0
      %1685 = vmatpush1.bf16.msra.mxu0 %v1676
      %1686 = vmatprep.subr.bf16.mxu0 0
      %1687 = vmatpush1.bf16.msra.mxu0 0
      %1688 = vmatprep.subr.bf16.mxu0 0
      %1689 = vmatpush1.bf16.msra.mxu0 0
      %1690 = vmatprep.subr.bf16.mxu0 0
      %1691 = vmatpush1.bf16.msra.mxu0 0
      %1692 = vmatprep.subr.bf16.mxu0 0
      %1693 = vmatpush1.bf16.msra.mxu0 0
      %1694 = vmatprep.subr.bf16.mxu0 0
      %1695 = vmatpush1.bf16.msra.mxu0 0
      %1696 = vmatprep.subr.bf16.mxu0 0
      %1697 = vmatpush1.bf16.msra.mxu0 0
      %1698 = vmatprep.subr.bf16.mxu0 0
      %1699 = vmatpush1.bf16.msra.mxu0 0
      %1700 = vmatprep.subr.bf16.mxu0 0
      %1701 = vmatpush1.bf16.msra.mxu0 0
      %1702 = vmatprep.subr.bf16.mxu0 0
      %1703 = vmatpush1.bf16.msra.mxu0 0
      %1704 = vmatprep.subr.bf16.mxu0 0
      %1705 = vmatpush1.bf16.msra.mxu0 0
      %1706 = vmatprep.subr.bf16.mxu0 0
      %1707 = vmatpush1.bf16.msra.mxu0 0
      %1708 = vmatprep.subr.bf16.mxu0 0
      %1709 = vmatpush1.bf16.msra.mxu0 0
      %1710 = vmatprep.subr.bf16.mxu0 0
      %1711 = vmatpush1.bf16.msra.mxu0 0
      %1712 = vmatprep.subr.bf16.mxu0 0
      %1713 = vmatpush1.bf16.msra.mxu0 0
      %1714 = vmatprep.mubr.bf16.mxu0 0
      %1715 = vmatmul.mubr.bf16.gmra.mrb[0].mxu0 %v1680
      %v1716 = vpop.f32.mrb[0].mxu0
      %v1717 = vadd.f32 %v1665, %v1716
      %v1718 = vpop.f32.mrb[0].mxu0
      %v1719 = vpop.f32.mrb[0].mxu0
      %v1720 = vadd.f32 %v1665, %v1719
      %v1721 = vpop.f32.mrb[0].mxu0
      %1722 = vdwg.mxu0
      %v1723 = vadd.f32 %v640, %v1717
      %v1724 = vadd.f32 %v641, %v1720
      %v1725 = vsel %vm666, %v1723, 0.0
      %1726 = vadd.xlane.f32.xlu0 %v1725
      %v1727 = vpop.xlane.xlu0 %1726
      %v1728 = vsel %vm666, %v1724, 0.0
      %1729 = vadd.xlane.f32.xlu0 %v1728
      %v1730 = vpop.xlane.xlu0 %1729
      %v1731 = vrcp.pop 32.0
      %v1732 = vmul.f32 %v1727, %v1731
      %v1733 = vmul.f32 %v1730, %v1731
      %v1734 = vsub.f32 %v1723, %v1732
      %v1735 = vsub.f32 %v1724, %v1733
      %v1736 = vmul.f32 %v1734, %v1734
      %v1737 = vmul.f32 %v1735, %v1735
      %v1738 = vsel %vm666, %v1736, 0.0
      %1739 = vadd.xlane.f32.xlu0 %v1738
      %v1740 = vpop.xlane.xlu0 %1739
      %v1741 = vsel %vm666, %v1737, 0.0
      %1742 = vadd.xlane.f32.xlu0 %v1741
      %v1743 = vpop.xlane.xlu0 %1742
      %v1744 = vmul.f32 %v1740, %v1731
      %v1745 = vmul.f32 %v1743, %v1731
      %v1746 = vadd.f32 %v1744, 1e-05
      %v1747 = vadd.f32 %v1745, 1e-05
      %v1748 = vrsqrt.pop %v1746
      %v1749 = vrsqrt.pop %v1747
      %v1750 = vmul.f32 %v1734, %v1748
      %v1751 = vmul.f32 %v1735, %v1749
      %v1752 = vld [vmem:[%s615] sm:$0x1]
      %v1754 = vlaneseq
      %v1755 = vshrl.u32 %v1754, 7
      %v1756 = vsub.s32 0, %v1755
      %v1757 = vrot.slane %v1752, %v1756
      %v1759 = vmul.f32 %v1750, %v1757
      %v1760 = vmul.f32 %v1751, %v1757
      %v1761 = vld [vmem:[%s618] sm:$0x1]
      %v1763 = vlaneseq
      %v1764 = vshrl.u32 %v1763, 7
      %v1765 = vsub.s32 0, %v1764
      %v1766 = vrot.slane %v1761, %v1765
      %v1768 = vadd.f32 %v1759, %v1766
      %v1769 = vadd.f32 %v1760, %v1766
      %v1770 = vpack.c.bf16 %v1769, %v1768
      %v1771 = vld [vmem:[%s601] sm:$0xf]
      %v1772 = vld [vmem:[%s601 + $0x4] sm:$0xf]
      %v1773 = vld [vmem:[%s601 + $0x8] sm:$0xf]
      %v1774 = vld [vmem:[%s601 + $0xc] sm:$0xf]
      %v1775 = vld [vmem:[%s604] sm:$0x1]
      %v1777 = vlaneseq
      %v1778 = vshrl.u32 %v1777, 7
      %v1779 = vsub.s32 0, %v1778
      %v1780 = vrot.slane %v1775, %v1779
      %v1786 = vunpack.c.l.b16 %v1771
      %v1787 = vunpack.c.l.b16 %v1772
      %v1788 = vunpack.c.l.b16 %v1773
      %v1789 = vunpack.c.l.b16 %v1774
      %v1790 = vpack.c.b16 %v1787, %v1786
      %v1791 = vpack.c.b16 %v1789, %v1788
      %v1795 = vsel %vm666, %v1770, 0
      %1797 = vmatprep.subr.bf16.mxu0 0
      %1798 = vmatpush1.bf16.msra.mxu0 %v1790
      %1799 = vmatprep.subr.bf16.mxu0 0
      %1800 = vmatpush1.bf16.msra.mxu0 %v1791
      %1801 = vmatprep.subr.bf16.mxu0 0
      %1802 = vmatpush1.bf16.msra.mxu0 0
      %1803 = vmatprep.subr.bf16.mxu0 0
      %1804 = vmatpush1.bf16.msra.mxu0 0
      %1805 = vmatprep.subr.bf16.mxu0 0
      %1806 = vmatpush1.bf16.msra.mxu0 0
      %1807 = vmatprep.subr.bf16.mxu0 0
      %1808 = vmatpush1.bf16.msra.mxu0 0
      %1809 = vmatprep.subr.bf16.mxu0 0
      %1810 = vmatpush1.bf16.msra.mxu0 0
      %1811 = vmatprep.subr.bf16.mxu0 0
      %1812 = vmatpush1.bf16.msra.mxu0 0
      %1813 = vmatprep.subr.bf16.mxu0 0
      %1814 = vmatpush1.bf16.msra.mxu0 0
      %1815 = vmatprep.subr.bf16.mxu0 0
      %1816 = vmatpush1.bf16.msra.mxu0 0
      %1817 = vmatprep.subr.bf16.mxu0 0
      %1818 = vmatpush1.bf16.msra.mxu0 0
      %1819 = vmatprep.subr.bf16.mxu0 0
      %1820 = vmatpush1.bf16.msra.mxu0 0
      %1821 = vmatprep.subr.bf16.mxu0 0
      %1822 = vmatpush1.bf16.msra.mxu0 0
      %1823 = vmatprep.subr.bf16.mxu0 0
      %1824 = vmatpush1.bf16.msra.mxu0 0
      %1825 = vmatprep.subr.bf16.mxu0 0
      %1826 = vmatpush1.bf16.msra.mxu0 0
      %1827 = vmatprep.subr.bf16.mxu0 0
      %1828 = vmatpush1.bf16.msra.mxu0 0
      %1829 = vmatprep.mubr.bf16.mxu0 0
      %1830 = vmatmul.mubr.bf16.gmra.mrb[0].mxu0 %v1795
      %v1831 = vpop.f32.mrb[0].mxu0
      %v1832 = vadd.f32 %v1780, %v1831
      %v1833 = vpop.f32.mrb[0].mxu0
      %v1834 = vpop.f32.mrb[0].mxu0
      %v1835 = vadd.f32 %v1780, %v1834
      %v1836 = vpop.f32.mrb[0].mxu0
      %1837 = vdwg.mxu0
      %v1838 = vmax.f32 %v1832, 0.0
      %v1839 = vmax.f32 %v1835, 0.0
      %v1840 = vpack.c.bf16 %v1839, %v1838
      %v1841 = vld [vmem:[%s609] sm:$0xf]
      %v1842 = vld [vmem:[%s609 + $0x4] sm:$0xf]
      %v1843 = vld [vmem:[%s609 + $0x8] sm:$0xf]
      %v1844 = vld [vmem:[%s609 + $0xc] sm:$0xf]
      %v1845 = vld [vmem:[%s609 + $0x10] sm:$0xf]
      %v1846 = vld [vmem:[%s609 + $0x14] sm:$0xf]
      %v1847 = vld [vmem:[%s609 + $0x18] sm:$0xf]
      %v1848 = vld [vmem:[%s609 + $0x1c] sm:$0xf]
      %v1849 = vld [vmem:[%s612] sm:$0x1]
      %v1851 = vlaneseq
      %v1852 = vshrl.u32 %v1851, 7
      %v1853 = vsub.s32 0, %v1852
      %v1854 = vrot.slane %v1849, %v1853
      %v1864 = vunpack.c.l.b16 %v1841
      %v1865 = vunpack.c.l.b16 %v1842
      %v1866 = vunpack.c.l.b16 %v1843
      %v1867 = vunpack.c.l.b16 %v1844
      %v1868 = vunpack.c.l.b16 %v1845
      %v1869 = vunpack.c.l.b16 %v1846
      %v1870 = vunpack.c.l.b16 %v1847
      %v1871 = vunpack.c.l.b16 %v1848
      %v1872 = vpack.c.b16 %v1865, %v1864
      %v1873 = vpack.c.b16 %v1867, %v1866
      %v1874 = vpack.c.b16 %v1869, %v1868
      %v1875 = vpack.c.b16 %v1871, %v1870
      %vm1880 = vcmask 523264
      %v1882 = vsel %vm1880, %v1840, 0
      %1884 = vmatprep.subr.bf16.mxu0 0
      %1885 = vmatpush1.bf16.msra.mxu0 %v1872
      %1886 = vmatprep.subr.bf16.mxu0 0
      %1887 = vmatpush1.bf16.msra.mxu0 %v1873
      %1888 = vmatprep.subr.bf16.mxu0 0
      %1889 = vmatpush1.bf16.msra.mxu0 %v1874
      %1890 = vmatprep.subr.bf16.mxu0 0
      %1891 = vmatpush1.bf16.msra.mxu0 %v1875
      %1892 = vmatprep.subr.bf16.mxu0 0
      %1893 = vmatpush1.bf16.msra.mxu0 0
      %1894 = vmatprep.subr.bf16.mxu0 0
      %1895 = vmatpush1.bf16.msra.mxu0 0
      %1896 = vmatprep.subr.bf16.mxu0 0
      %1897 = vmatpush1.bf16.msra.mxu0 0
      %1898 = vmatprep.subr.bf16.mxu0 0
      %1899 = vmatpush1.bf16.msra.mxu0 0
      %1900 = vmatprep.subr.bf16.mxu0 0
      %1901 = vmatpush1.bf16.msra.mxu0 0
      %1902 = vmatprep.subr.bf16.mxu0 0
      %1903 = vmatpush1.bf16.msra.mxu0 0
      %1904 = vmatprep.subr.bf16.mxu0 0
      %1905 = vmatpush1.bf16.msra.mxu0 0
      %1906 = vmatprep.subr.bf16.mxu0 0
      %1907 = vmatpush1.bf16.msra.mxu0 0
      %1908 = vmatprep.subr.bf16.mxu0 0
      %1909 = vmatpush1.bf16.msra.mxu0 0
      %1910 = vmatprep.subr.bf16.mxu0 0
      %1911 = vmatpush1.bf16.msra.mxu0 0
      %1912 = vmatprep.subr.bf16.mxu0 0
      %1913 = vmatpush1.bf16.msra.mxu0 0
      %1914 = vmatprep.subr.bf16.mxu0 0
      %1915 = vmatpush1.bf16.msra.mxu0 0
      %1916 = vmatprep.mubr.bf16.mxu0 0
      %1917 = vmatmul.mubr.bf16.gmra.mrb[0].mxu0 %v1882
      %v1918 = vpop.f32.mrb[0].mxu0
      %v1919 = vadd.f32 %v1854, %v1918
      %v1920 = vpop.f32.mrb[0].mxu0
      %v1921 = vpop.f32.mrb[0].mxu0
      %v1922 = vadd.f32 %v1854, %v1921
      %v1923 = vpop.f32.mrb[0].mxu0
      %1924 = vdwg.mxu0
      %v1925 = vadd.f32 %v1768, %v1919
      %v1926 = vadd.f32 %v1769, %v1922
      %v1927 = vsel %vm666, %v1925, 0.0
      %1928 = vadd.xlane.f32.xlu0 %v1927
      %v1929 = vpop.xlane.xlu0 %1928
      %v1930 = vsel %vm666, %v1926, 0.0
      %1931 = vadd.xlane.f32.xlu0 %v1930
      %v1932 = vpop.xlane.xlu0 %1931
      %v1933 = vmul.f32 %v1929, %v1731
      %v1934 = vmul.f32 %v1932, %v1731
      %v1935 = vsub.f32 %v1925, %v1933
      %v1936 = vsub.f32 %v1926, %v1934
      %v1937 = vmul.f32 %v1935, %v1935
      %v1938 = vmul.f32 %v1936, %v1936
      %v1939 = vsel %vm666, %v1937, 0.0
      %1940 = vadd.xlane.f32.xlu0 %v1939
      %v1941 = vpop.xlane.xlu0 %1940
      %v1942 = vsel %vm666, %v1938, 0.0
      %1943 = vadd.xlane.f32.xlu0 %v1942
      %v1944 = vpop.xlane.xlu0 %1943
      %v1945 = vmul.f32 %v1941, %v1731
      %v1946 = vmul.f32 %v1944, %v1731
      %v1947 = vadd.f32 %v1945, 1e-05
      %v1948 = vadd.f32 %v1946, 1e-05
      %v1949 = vrsqrt.pop %v1947
      %v1950 = vrsqrt.pop %v1948
      %v1951 = vmul.f32 %v1935, %v1949
      %v1952 = vmul.f32 %v1936, %v1950
      %v1953 = vld [vmem:[%s621] sm:$0x1]
      %v1955 = vlaneseq
      %v1956 = vshrl.u32 %v1955, 7
      %v1957 = vsub.s32 0, %v1956
      %v1958 = vrot.slane %v1953, %v1957
      %v1960 = vmul.f32 %v1951, %v1958
      %v1961 = vmul.f32 %v1952, %v1958
      %v1962 = vld [vmem:[%s624] sm:$0x1]
      %v1964 = vlaneseq
      %v1965 = vshrl.u32 %v1964, 7
      %v1966 = vsub.s32 0, %v1965
      %v1967 = vrot.slane %v1962, %v1966
      %v1969 = vadd.f32 %v1960, %v1967
      %v1970 = vadd.f32 %v1961, %v1967
      %1971 = vst.msk [vmem:[%s14] sm:$0xff] %vm666, %v1969
      %1972 = vst.msk [vmem:[%s14 + $0x8] sm:$0xff] %vm666, %v1970
      // Predicated region
      $region81: #{transformer_net_forward.2} parent=75 // pred_check
        %p1973 = pneg %p392
      $region82: #{transformer_net_forward.2} parent=75 // pred_check_branch
        %1975 = sbr.rel (%p1973) target = $region84
      $region83: #{transformer_net_forward.2} parent=75 // pred_region
        _
      $region84: #{transformer_net_forward.2} parent=75 // pred_fallthru
        _
      // Predicated region
      $region85: #{transformer_net_forward.2} parent=75 // pred_check
        %p1976 = pneg %p392
      $region86: #{transformer_net_forward.2} parent=75 // pred_check_branch
        %1978 = sbr.rel (%p1976) target = $region88
      $region87: #{transformer_net_forward.2} parent=75 // pred_region
        _
      $region88: #{transformer_net_forward.2} parent=75 // pred_fallthru
        _
    $region76: #{transformer_net_forward.2} parent=5 // pred_fallthru
      _
    %p1979 = scmp.le.s32.totalorder 2, %s20
    // Predicated region
    $region89: #{transformer_net_forward.2} parent=5 // pred_check
      %p1980 = pneg %p1979
    $region90: #{transformer_net_forward.2} parent=5 // pred_check_branch
      %1982 = sbr.rel (%p1980) target = $region92
    $region91: #{transformer_net_forward.2} parent=5 // pred_region
      %s1983 = ssub.s32 %s20, 2
    $region92: #{transformer_net_forward.2} parent=5 // pred_fallthru
      _
  $region6: #{transformer_net_forward.2} parent=0 // loop_footer
    %s24 = sadd.s32 1, %s20
  $region7: #{transformer_net_forward.2} parent=0 // loop_footer_branch
    %19 = sbr.rel target = $region3
  $region8: #{transformer_net_forward.2} parent=0 // loop_exit
    _

</llo_original>
